<compile_context>
chip_gen: v5e
topology: v5e:2x2
jax: 0.10.0
libtpu: 0.0.40
codegen_flags: <defaults>
</compile_context>

<pallas_src>
import functools

import jax
import jax.numpy as jnp
import numpy as np
from jax.experimental import pallas as pl
from jax.experimental.pallas import tpu as pltpu


# ---------------------------------------------------------------------------
# Fused LSTM layer kernel: per grid step (one chunk of t_chunk timesteps)
#   1) chunk input projection (big-M MXU matmul) into VMEM scratch
#   2) serial recurrence over the chunk with vreg-resident (h, c)
# hT/cT are resident outputs (constant index_map) carrying state across chunks.
# ---------------------------------------------------------------------------
def _lstm_fused_kernel(x_ref, wih_ref, whh_ref, b_ref, h0_ref, c0_ref,
                       y_ref, hT_ref, cT_ref, xp_ref, *,
                       t_chunk, batch, hidden, t_real, needs_mask,
                       compute_dtype, unroll):
    step = pl.program_id(0)
    H = hidden
    B = batch

    @pl.when(step == 0)
    def _():
        hT_ref[...] = h0_ref[...]
        cT_ref[...] = c0_ref[...]

    # ---- fused chunk input projection: (t_chunk*B, D) @ (D, 4H) + bias ----
    x_chunk = x_ref[...].astype(compute_dtype)            # (t_chunk*B, D)
    xp_ref[...] = (jnp.dot(x_chunk, wih_ref[...],
                           preferred_element_type=jnp.float32)
                   + b_ref[...])                           # f32 (t_chunk*B, 4H)

    w_hh = whh_ref[...]                                    # (H, 4H) compute dtype

    def body(t, carry):
        h, c = carry                                       # f32 (B, H)
        row = pl.multiple_of(t * B, B)
        # gates = x_proj[t] + h_prev @ W_hh^T  (single MXU push per step)
        gates = xp_ref[pl.ds(row, B), :] + jnp.dot(
            h.astype(compute_dtype), w_hh, preferred_element_type=jnp.float32)
        i_g = jax.nn.sigmoid(gates[:, 0 * H:1 * H])
        f_g = jax.nn.sigmoid(gates[:, 1 * H:2 * H])
        g_g = jnp.tanh(gates[:, 2 * H:3 * H])
        o_g = jax.nn.sigmoid(gates[:, 3 * H:4 * H])
        c_new = f_g * c + i_g * g_g                        # f32 elementwise
        h_new = o_g * jnp.tanh(c_new)
        if needs_mask:                                     # static Python bool
            valid = (step * t_chunk + t) < t_real          # padded tail: no-op
            h_new = jnp.where(valid, h_new, h)
            c_new = jnp.where(valid, c_new, c)
        y_ref[t] = h_new.astype(y_ref.dtype)
        return h_new, c_new

    h_fin, c_fin = jax.lax.fori_loop(
        0, t_chunk, body, (hT_ref[...], cT_ref[...]), unroll=unroll)
    hT_ref[...] = h_fin
    cT_ref[...] = c_fin


def lstm_layer_pallas(x_tbd, w_ih_t, w_hh_t, b, h0, c0, *,
                      t_chunk=8, compute_dtype=jnp.bfloat16, unroll=True):
    """One LSTM layer over the full sequence (fused projection + recurrence).

    x_tbd : (T, B, D) time-major input (f32 or bf16)
    w_ih_t: (D, 4H), w_hh_t: (H, 4H), b: (1, 4H)   (float32 params)
    h0,c0 : (B, H) float32
    returns (y: (T, B, H) in compute_dtype, hT: (B, H) f32, cT: (B, H) f32)
    """
    T, B, D = x_tbd.shape
    H = h0.shape[-1]
    out_dtype = jnp.dtype(compute_dtype)   # bf16 inter-layer y on the fast path

    # Pad time to a multiple of t_chunk (masked inside kernel) instead of
    # collapsing t_chunk -- avoids the per-timestep grid-overhead cliff.
    n_chunks = pl.cdiv(T, t_chunk)
    T_pad = n_chunks * t_chunk
    if T_pad != T:
        x_tbd = jnp.pad(x_tbd, ((0, T_pad - T), (0, 0), (0, 0)))
    x2d = x_tbd.reshape(T_pad * B, D)       # rows for the chunk projection

    kernel = functools.partial(
        _lstm_fused_kernel, t_chunk=t_chunk, batch=B, hidden=H,
        t_real=T, needs_mask=(T_pad != T),
        compute_dtype=compute_dtype, unroll=unroll)

    y, hT, cT = pl.pallas_call(
        kernel,
        out_shape=(jax.ShapeDtypeStruct((T_pad, B, H), out_dtype),
                   jax.ShapeDtypeStruct((B, H), jnp.float32),
                   jax.ShapeDtypeStruct((B, H), jnp.float32)),
        grid_spec=pltpu.PrefetchScalarGridSpec(
            num_scalar_prefetch=0,
            grid=(n_chunks,),
            in_specs=[
                pl.BlockSpec((t_chunk * B, D), lambda i: (i, 0)),    # x rows
                pl.BlockSpec((D, 4 * H), lambda i: (0, 0)),          # W_ih^T
                pl.BlockSpec((H, 4 * H), lambda i: (0, 0)),          # W_hh^T
                pl.BlockSpec((1, 4 * H), lambda i: (0, 0)),          # bias
                pl.BlockSpec((B, H), lambda i: (0, 0)),              # h0
                pl.BlockSpec((B, H), lambda i: (0, 0)),              # c0
            ],
            out_specs=[
                pl.BlockSpec((t_chunk, B, H), lambda i: (i, 0, 0)),  # y
                pl.BlockSpec((B, H), lambda i: (0, 0)),              # hT (resident)
                pl.BlockSpec((B, H), lambda i: (0, 0)),              # cT (resident)
            ],
            scratch_shapes=[
                pltpu.VMEM((t_chunk * B, 4 * H), jnp.float32),       # x_proj chunk
            ],
        ),
        # Time chunks are strictly sequential (VMEM-resident carried state).
        compiler_params=pltpu.CompilerParams(
            dimension_semantics=("arbitrary",)),
    )(x2d, w_ih_t.astype(compute_dtype), w_hh_t.astype(compute_dtype),
      b, h0, c0)

    if T_pad != T:
        y = y[:T]
    return y, hT, cT


# ---------------------------------------------------------------------------
# Pure-JAX float32 reference of the same LSTM layer (for verification).
# ---------------------------------------------------------------------------
def lstm_layer_ref(x_tbd, w_ih_t, w_hh_t, b, h0, c0):
    def step(carry, x_t):
        h, c = carry
        gates = x_t @ w_ih_t + h @ w_hh_t + b
        i, f, g, o = jnp.split(gates, 4, axis=-1)
        i = jax.nn.sigmoid(i)
        f = jax.nn.sigmoid(f)
        g = jnp.tanh(g)
        o = jax.nn.sigmoid(o)
        c = f * c + i * g
        h = o * jnp.tanh(c)
        return (h, c), h

    (hT, cT), ys = jax.lax.scan(step, (h0, c0), x_tbd)
    return ys, hT, cT


# ---------------------------------------------------------------------------
# Module glue: stacked layers, encoder -> decoder with state hand-off.
# ---------------------------------------------------------------------------
def init_lstm_params(key, input_size, hidden_size, num_layers):
    """Deterministic per-layer params, PyTorch-style uniform(-k, k), k=1/sqrt(H)."""
    params = []
    k = 1.0 / np.sqrt(hidden_size)
    for layer in range(num_layers):
        d_in = input_size if layer == 0 else hidden_size
        key, k1, k2, k3, k4 = jax.random.split(key, 5)
        w_ih = jax.random.uniform(k1, (4 * hidden_size, d_in), jnp.float32, -k, k)
        w_hh = jax.random.uniform(k2, (4 * hidden_size, hidden_size), jnp.float32, -k, k)
        b_ih = jax.random.uniform(k3, (4 * hidden_size,), jnp.float32, -k, k)
        b_hh = jax.random.uniform(k4, (4 * hidden_size,), jnp.float32, -k, k)
        params.append({
            "w_ih_t": w_ih.T,                    # (D_in, 4H)
            "w_hh_t": w_hh.T,                    # (H, 4H)
            "b": (b_ih + b_hh)[None, :],         # (1, 4H)
        })
    return params, key


def run_stacked_lstm(layer_fn, x_tbd, params, h0_stack, c0_stack):
    """num_layers stacked LSTM, returns (last-layer outputs, hN, cN stacks)."""
    y = x_tbd
    h_finals, c_finals = [], []
    for layer, p in enumerate(params):
        y, hT, cT = layer_fn(y, p["w_ih_t"], p["w_hh_t"], p["b"],
                             h0_stack[layer], c0_stack[layer])
        h_finals.append(hT)
        c_finals.append(cT)
    return y, jnp.stack(h_finals), jnp.stack(c_finals)


def cai_lstm_forward(layer_fn, x_btd, enc_params, dec_params, hidden_size):
    """Forward of CAI_LSTM. x_btd is batch_first (B, T, D); returns (B, T, D) f32."""
    B, T, D = x_btd.shape
    num_layers = len(enc_params)
    x_tbd = jnp.transpose(x_btd, (1, 0, 2))              # time-major

    zeros = jnp.zeros((num_layers, B, hidden_size), jnp.float32)
    encoded, h_enc, c_enc = run_stacked_lstm(layer_fn, x_tbd, enc_params,
                                             zeros, zeros)
    # decoder: hidden size == input_size (required for the state hand-off)
    decoded, _, _ = run_stacked_lstm(layer_fn, encoded, dec_params, h_enc, c_enc)
    return jnp.transpose(decoded, (1, 0, 2)).astype(jnp.float32)


if __name__ == "__main__":
    # Small, lane-aligned shapes consistent with the module (production is
    # input_size == hidden_size == 512; the decoder state hand-off requires
    # input_size == hidden_size, here 128 == 128).
    B, T = 8, 16
    input_size = 128
    hidden_size = 128
    num_layers = 2
    T_CHUNK = 8

    key = jax.random.PRNGKey(0)
    enc_params, key = init_lstm_params(key, input_size, hidden_size, num_layers)
    dec_params, key = init_lstm_params(key, hidden_size, input_size, num_layers)
    key, kx = jax.random.split(key)
    x = jax.random.normal(kx, (B, T, input_size), jnp.float32)

    # Pure-JAX float32 reference of the same math.
    ref = jax.block_until_ready(
        cai_lstm_forward(lstm_layer_ref, x, enc_params, dec_params, hidden_size))

    # 1) Exact-math check: Pallas kernels with float32 operands end-to-end.
    layer_f32 = functools.partial(lstm_layer_pallas, t_chunk=T_CHUNK,
                                  compute_dtype=jnp.float32)
    out_f32 = jax.block_until_ready(
        cai_lstm_forward(layer_f32, x, enc_params, dec_params, hidden_size))
    assert out_f32.shape == (B, T, input_size)
    np.testing.assert_allclose(np.asarray(out_f32), np.asarray(ref),
                               rtol=5e-5, atol=5e-5)

    # 2) Non-divisible T (11 % 8 != 0) exercises the padded/masked tail path;
    #    exact f32 check so any masking bug would be caught precisely.
    x_odd = x[:, :11]
    ref_odd = jax.block_until_ready(
        cai_lstm_forward(lstm_layer_ref, x_odd, enc_params, dec_params, hidden_size))
    out_odd = jax.block_until_ready(
        cai_lstm_forward(layer_f32, x_odd, enc_params, dec_params, hidden_size))
    assert out_odd.shape == (B, 11, input_size)
    np.testing.assert_allclose(np.asarray(out_odd), np.asarray(ref_odd),
                               rtol=5e-5, atol=5e-5)

    # 3) Fast path: bf16 matmul operands + bf16 inter-layer activations,
    #    f32 MXU accumulate / gate math / carried state.
    layer_bf16 = functools.partial(lstm_layer_pallas, t_chunk=T_CHUNK,
                                   compute_dtype=jnp.bfloat16)
    out_bf16 = jax.block_until_ready(
        cai_lstm_forward(layer_bf16, x, enc_params, dec_params, hidden_size))
    assert out_bf16.shape == (B, T, input_size)
    np.testing.assert_allclose(np.asarray(out_bf16), np.asarray(ref),
                               rtol=5e-2, atol=5e-2)

    print("KERNEL_OK")
</pallas_src>

<mosaic_0001>
module attributes {stable_mosaic.version = 11 : i64} {
  func.func @_lstm_fused_kernel(%arg0: i32, %arg1: memref<64x128xf32, #tpu.memory_space<vmem>>, %arg2: memref<128x512xf32, #tpu.memory_space<vmem>>, %arg3: memref<128x512xf32, #tpu.memory_space<vmem>>, %arg4: memref<1x512xf32, #tpu.memory_space<vmem>>, %arg5: memref<8x128xf32, #tpu.memory_space<vmem>>, %arg6: memref<8x128xf32, #tpu.memory_space<vmem>>, %arg7: memref<8x8x128xf32, #tpu.memory_space<vmem>>, %arg8: memref<8x128xf32, #tpu.memory_space<vmem>>, %arg9: memref<8x128xf32, #tpu.memory_space<vmem>>, %arg10: memref<64x512xf32, #tpu.memory_space<vmem>>) attributes {dimension_semantics = [#tpu.dimension_semantics<arbitrary>], iteration_bounds = array<i64: 2>, scalar_prefetch = 0 : i64, scratch_operands = 1 : i64, tpu.core_type = #tpu.core_type<tc>, window_params = [{transform_indices = @transform_0, window_bounds = array<i64: 64, 128>}, {pipeline_mode = #tpu.pipeline_mode<synchronous>, transform_indices = @transform_1, window_bounds = array<i64: 128, 512>}, {pipeline_mode = #tpu.pipeline_mode<synchronous>, transform_indices = @transform_2, window_bounds = array<i64: 128, 512>}, {pipeline_mode = #tpu.pipeline_mode<synchronous>, transform_indices = @transform_3, window_bounds = array<i64: 1, 512>}, {pipeline_mode = #tpu.pipeline_mode<synchronous>, transform_indices = @transform_4, window_bounds = array<i64: 8, 128>}, {pipeline_mode = #tpu.pipeline_mode<synchronous>, transform_indices = @transform_5, window_bounds = array<i64: 8, 128>}, {transform_indices = @transform_6, window_bounds = array<i64: 8, 8, 128>}, {pipeline_mode = #tpu.pipeline_mode<synchronous>, transform_indices = @transform_7, window_bounds = array<i64: 8, 128>}, {pipeline_mode = #tpu.pipeline_mode<synchronous>, transform_indices = @transform_8, window_bounds = array<i64: 8, 128>}]} {
    %c0_i32 = arith.constant 0 : i32
    %0 = arith.cmpi eq, %arg0, %c0_i32 : i32
    %1 = arith.extui %0 : i1 to i32
    %c0_i32_0 = arith.constant 0 : i32
    %2 = arith.cmpi ne, %1, %c0_i32_0 : i32
    scf.if %2 {
      %c0_83 = arith.constant 0 : index
      %c0_84 = arith.constant 0 : index
      %295 = vector.load %arg5[%c0_83, %c0_84] : memref<8x128xf32, #tpu.memory_space<vmem>>, vector<8x128xf32>
      %c0_85 = arith.constant 0 : index
      %c0_86 = arith.constant 0 : index
      %296 = vector.load %arg8[%c0_85, %c0_86] : memref<8x128xf32, #tpu.memory_space<vmem>>, vector<8x128xf32>
      tpu.vector_store %arg8[%c0_85, %c0_86], %295 {strides = array<i32>} : memref<8x128xf32, #tpu.memory_space<vmem>>, vector<8x128xf32>,
      %c0_87 = arith.constant 0 : index
      %c0_88 = arith.constant 0 : index
      %297 = vector.load %arg6[%c0_87, %c0_88] : memref<8x128xf32, #tpu.memory_space<vmem>>, vector<8x128xf32>
      %c0_89 = arith.constant 0 : index
      %c0_90 = arith.constant 0 : index
      %298 = vector.load %arg9[%c0_89, %c0_90] : memref<8x128xf32, #tpu.memory_space<vmem>>, vector<8x128xf32>
      tpu.vector_store %arg9[%c0_89, %c0_90], %297 {strides = array<i32>} : memref<8x128xf32, #tpu.memory_space<vmem>>, vector<8x128xf32>,
    } else {
    }
    %c0 = arith.constant 0 : index
    %c0_1 = arith.constant 0 : index
    %3 = vector.load %arg1[%c0, %c0_1] : memref<64x128xf32, #tpu.memory_space<vmem>>, vector<64x128xf32>
    %c0_2 = arith.constant 0 : index
    %c0_3 = arith.constant 0 : index
    %4 = vector.load %arg2[%c0_2, %c0_3] : memref<128x512xf32, #tpu.memory_space<vmem>>, vector<128x512xf32>
    %cst = arith.constant dense<0.000000e+00> : vector<64x512xf32>
    %5 = tpu.matmul %3, %4, %cst {dimension_numbers = #tpu.dot_dimension_numbers<[1], [0], [0], [1], [0, 0, 1, 1], [], []>} : vector<64x128xf32>, vector<128x512xf32>, vector<64x512xf32> -> vector<64x512xf32>
    %c0_4 = arith.constant 0 : index
    %c0_5 = arith.constant 0 : index
    %6 = vector.load %arg4[%c0_4, %c0_5] : memref<1x512xf32, #tpu.memory_space<vmem>>, vector<1x512xf32>
    %7 = vector.broadcast %6 : vector<1x512xf32> to vector<64x512xf32>
    %8 = arith.addf %5, %7 : vector<64x512xf32>
    %c0_6 = arith.constant 0 : index
    %c0_7 = arith.constant 0 : index
    %9 = vector.load %arg10[%c0_6, %c0_7] : memref<64x512xf32, #tpu.memory_space<vmem>>, vector<64x512xf32>
    tpu.vector_store %arg10[%c0_6, %c0_7], %8 {strides = array<i32>} : memref<64x512xf32, #tpu.memory_space<vmem>>, vector<64x512xf32>,
    %c0_8 = arith.constant 0 : index
    %c0_9 = arith.constant 0 : index
    %10 = vector.load %arg3[%c0_8, %c0_9] : memref<128x512xf32, #tpu.memory_space<vmem>>, vector<128x512xf32>
    %c0_10 = arith.constant 0 : index
    %c0_11 = arith.constant 0 : index
    %11 = vector.load %arg8[%c0_10, %c0_11] : memref<8x128xf32, #tpu.memory_space<vmem>>, vector<8x128xf32>
    %c0_12 = arith.constant 0 : index
    %c0_13 = arith.constant 0 : index
    %12 = vector.load %arg9[%c0_12, %c0_13] : memref<8x128xf32, #tpu.memory_space<vmem>>, vector<8x128xf32>
    %c0_i32_14 = arith.constant 0 : i32
    %c8_i32 = arith.constant 8 : i32
    %13 = arith.muli %c0_i32_14, %c8_i32 : i32
    %14 = tpu.assume_multiple %13, 8 : i32
    %15 = arith.index_cast %14 : i32 to index
    %c0_15 = arith.constant 0 : index
    %16 = vector.load %arg10[%15, %c0_15] : memref<64x512xf32, #tpu.memory_space<vmem>>, vector<8x512xf32>
    %cst_16 = arith.constant dense<0.000000e+00> : vector<8x512xf32>
    %17 = tpu.matmul %11, %10, %cst_16 {dimension_numbers = #tpu.dot_dimension_numbers<[1], [0], [0], [1], [0, 0, 1, 1], [], []>} : vector<8x128xf32>, vector<128x512xf32>, vector<8x512xf32> -> vector<8x512xf32>
    %18 = arith.addf %16, %17 : vector<8x512xf32>
    %19 = vector.extract_strided_slice %18 {offsets = [0, 0], sizes = [8, 128], strides = [1, 1]} : vector<8x512xf32> to vector<8x128xf32>
    %20 = arith.negf %19 : vector<8x128xf32>
    %21 = math.exp %20 : vector<8x128xf32>
    %cst_17 = arith.constant 1.000000e+00 : f32
    %22 = vector.broadcast %cst_17 : f32 to vector<8x128xf32>
    %23 = arith.addf %22, %21 : vector<8x128xf32>
    %24 = arith.divf %22, %23 : vector<8x128xf32>
    %25 = vector.extract_strided_slice %18 {offsets = [0, 128], sizes = [8, 128], strides = [1, 1]} : vector<8x512xf32> to vector<8x128xf32>
    %26 = arith.negf %25 : vector<8x128xf32>
    %27 = math.exp %26 : vector<8x128xf32>
    %cst_18 = arith.constant 1.000000e+00 : f32
    %28 = vector.broadcast %cst_18 : f32 to vector<8x128xf32>
    %29 = arith.addf %28, %27 : vector<8x128xf32>
    %30 = arith.divf %28, %29 : vector<8x128xf32>
    %31 = vector.extract_strided_slice %18 {offsets = [0, 256], sizes = [8, 128], strides = [1, 1]} : vector<8x512xf32> to vector<8x128xf32>
    %32 = math.tanh %31 : vector<8x128xf32>
    %33 = vector.extract_strided_slice %18 {offsets = [0, 384], sizes = [8, 128], strides = [1, 1]} : vector<8x512xf32> to vector<8x128xf32>
    %34 = arith.negf %33 : vector<8x128xf32>
    %35 = math.exp %34 : vector<8x128xf32>
    %cst_19 = arith.constant 1.000000e+00 : f32
    %36 = vector.broadcast %cst_19 : f32 to vector<8x128xf32>
    %37 = arith.addf %36, %35 : vector<8x128xf32>
    %38 = arith.divf %36, %37 : vector<8x128xf32>
    %39 = arith.mulf %30, %12 : vector<8x128xf32>
    %40 = arith.mulf %24, %32 : vector<8x128xf32>
    %41 = arith.addf %39, %40 : vector<8x128xf32>
    %42 = math.tanh %41 : vector<8x128xf32>
    %43 = arith.mulf %38, %42 : vector<8x128xf32>
    %44 = arith.index_cast %c0_i32_14 : i32 to index
    %c0_20 = arith.constant 0 : index
    %c0_21 = arith.constant 0 : index
    %45 = vector.load %arg7[%44, %c0_20, %c0_21] : memref<8x8x128xf32, #tpu.memory_space<vmem>>, vector<1x8x128xf32>
    %46 = vector.shape_cast %45 : vector<1x8x128xf32> to vector<8x128xf32>
    %47 = vector.shape_cast %43 : vector<8x128xf32> to vector<1x8x128xf32>
    tpu.vector_store %arg7[%44, %c0_20, %c0_21], %47 {strides = array<i32>} : memref<8x8x128xf32, #tpu.memory_space<vmem>>, vector<1x8x128xf32>,
    %c1_i32 = arith.constant 1 : i32
    %c8_i32_22 = arith.constant 8 : i32
    %48 = arith.muli %c1_i32, %c8_i32_22 : i32
    %49 = tpu.assume_multiple %48, 8 : i32
    %50 = arith.index_cast %49 : i32 to index
    %c0_23 = arith.constant 0 : index
    %51 = vector.load %arg10[%50, %c0_23] : memref<64x512xf32, #tpu.memory_space<vmem>>, vector<8x512xf32>
    %cst_24 = arith.constant dense<0.000000e+00> : vector<8x512xf32>
    %52 = tpu.matmul %43, %10, %cst_24 {dimension_numbers = #tpu.dot_dimension_numbers<[1], [0], [0], [1], [0, 0, 1, 1], [], []>} : vector<8x128xf32>, vector<128x512xf32>, vector<8x512xf32> -> vector<8x512xf32>
    %53 = arith.addf %51, %52 : vector<8x512xf32>
    %54 = vector.extract_strided_slice %53 {offsets = [0, 0], sizes = [8, 128], strides = [1, 1]} : vector<8x512xf32> to vector<8x128xf32>
    %55 = arith.negf %54 : vector<8x128xf32>
    %56 = math.exp %55 : vector<8x128xf32>
    %cst_25 = arith.constant 1.000000e+00 : f32
    %57 = vector.broadcast %cst_25 : f32 to vector<8x128xf32>
    %58 = arith.addf %57, %56 : vector<8x128xf32>
    %59 = arith.divf %57, %58 : vector<8x128xf32>
    %60 = vector.extract_strided_slice %53 {offsets = [0, 128], sizes = [8, 128], strides = [1, 1]} : vector<8x512xf32> to vector<8x128xf32>
    %61 = arith.negf %60 : vector<8x128xf32>
    %62 = math.exp %61 : vector<8x128xf32>
    %cst_26 = arith.constant 1.000000e+00 : f32
    %63 = vector.broadcast %cst_26 : f32 to vector<8x128xf32>
    %64 = arith.addf %63, %62 : vector<8x128xf32>
    %65 = arith.divf %63, %64 : vector<8x128xf32>
    %66 = vector.extract_strided_slice %53 {offsets = [0, 256], sizes = [8, 128], strides = [1, 1]} : vector<8x512xf32> to vector<8x128xf32>
    %67 = math.tanh %66 : vector<8x128xf32>
    %68 = vector.extract_strided_slice %53 {offsets = [0, 384], sizes = [8, 128], strides = [1, 1]} : vector<8x512xf32> to vector<8x128xf32>
    %69 = arith.negf %68 : vector<8x128xf32>
    %70 = math.exp %69 : vector<8x128xf32>
    %cst_27 = arith.constant 1.000000e+00 : f32
    %71 = vector.broadcast %cst_27 : f32 to vector<8x128xf32>
    %72 = arith.addf %71, %70 : vector<8x128xf32>
    %73 = arith.divf %71, %72 : vector<8x128xf32>
    %74 = arith.mulf %65, %41 : vector<8x128xf32>
    %75 = arith.mulf %59, %67 : vector<8x128xf32>
    %76 = arith.addf %74, %75 : vector<8x128xf32>
    %77 = math.tanh %76 : vector<8x128xf32>
    %78 = arith.mulf %73, %77 : vector<8x128xf32>
    %79 = arith.index_cast %c1_i32 : i32 to index
    %c0_28 = arith.constant 0 : index
    %c0_29 = arith.constant 0 : index
    %80 = vector.load %arg7[%79, %c0_28, %c0_29] : memref<8x8x128xf32, #tpu.memory_space<vmem>>, vector<1x8x128xf32>
    %81 = vector.shape_cast %80 : vector<1x8x128xf32> to vector<8x128xf32>
    %82 = vector.shape_cast %78 : vector<8x128xf32> to vector<1x8x128xf32>
    tpu.vector_store %arg7[%79, %c0_28, %c0_29], %82 {strides = array<i32>} : memref<8x8x128xf32, #tpu.memory_space<vmem>>, vector<1x8x128xf32>,
    %c2_i32 = arith.constant 2 : i32
    %c8_i32_30 = arith.constant 8 : i32
    %83 = arith.muli %c2_i32, %c8_i32_30 : i32
    %84 = tpu.assume_multiple %83, 8 : i32
    %85 = arith.index_cast %84 : i32 to index
    %c0_31 = arith.constant 0 : index
    %86 = vector.load %arg10[%85, %c0_31] : memref<64x512xf32, #tpu.memory_space<vmem>>, vector<8x512xf32>
    %cst_32 = arith.constant dense<0.000000e+00> : vector<8x512xf32>
    %87 = tpu.matmul %78, %10, %cst_32 {dimension_numbers = #tpu.dot_dimension_numbers<[1], [0], [0], [1], [0, 0, 1, 1], [], []>} : vector<8x128xf32>, vector<128x512xf32>, vector<8x512xf32> -> vector<8x512xf32>
    %88 = arith.addf %86, %87 : vector<8x512xf32>
    %89 = vector.extract_strided_slice %88 {offsets = [0, 0], sizes = [8, 128], strides = [1, 1]} : vector<8x512xf32> to vector<8x128xf32>
    %90 = arith.negf %89 : vector<8x128xf32>
    %91 = math.exp %90 : vector<8x128xf32>
    %cst_33 = arith.constant 1.000000e+00 : f32
    %92 = vector.broadcast %cst_33 : f32 to vector<8x128xf32>
    %93 = arith.addf %92, %91 : vector<8x128xf32>
    %94 = arith.divf %92, %93 : vector<8x128xf32>
    %95 = vector.extract_strided_slice %88 {offsets = [0, 128], sizes = [8, 128], strides = [1, 1]} : vector<8x512xf32> to vector<8x128xf32>
    %96 = arith.negf %95 : vector<8x128xf32>
    %97 = math.exp %96 : vector<8x128xf32>
    %cst_34 = arith.constant 1.000000e+00 : f32
    %98 = vector.broadcast %cst_34 : f32 to vector<8x128xf32>
    %99 = arith.addf %98, %97 : vector<8x128xf32>
    %100 = arith.divf %98, %99 : vector<8x128xf32>
    %101 = vector.extract_strided_slice %88 {offsets = [0, 256], sizes = [8, 128], strides = [1, 1]} : vector<8x512xf32> to vector<8x128xf32>
    %102 = math.tanh %101 : vector<8x128xf32>
    %103 = vector.extract_strided_slice %88 {offsets = [0, 384], sizes = [8, 128], strides = [1, 1]} : vector<8x512xf32> to vector<8x128xf32>
    %104 = arith.negf %103 : vector<8x128xf32>
    %105 = math.exp %104 : vector<8x128xf32>
    %cst_35 = arith.constant 1.000000e+00 : f32
    %106 = vector.broadcast %cst_35 : f32 to vector<8x128xf32>
    %107 = arith.addf %106, %105 : vector<8x128xf32>
    %108 = arith.divf %106, %107 : vector<8x128xf32>
    %109 = arith.mulf %100, %76 : vector<8x128xf32>
    %110 = arith.mulf %94, %102 : vector<8x128xf32>
    %111 = arith.addf %109, %110 : vector<8x128xf32>
    %112 = math.tanh %111 : vector<8x128xf32>
    %113 = arith.mulf %108, %112 : vector<8x128xf32>
    %114 = arith.index_cast %c2_i32 : i32 to index
    %c0_36 = arith.constant 0 : index
    %c0_37 = arith.constant 0 : index
    %115 = vector.load %arg7[%114, %c0_36, %c0_37] : memref<8x8x128xf32, #tpu.memory_space<vmem>>, vector<1x8x128xf32>
    %116 = vector.shape_cast %115 : vector<1x8x128xf32> to vector<8x128xf32>
    %117 = vector.shape_cast %113 : vector<8x128xf32> to vector<1x8x128xf32>
    tpu.vector_store %arg7[%114, %c0_36, %c0_37], %117 {strides = array<i32>} : memref<8x8x128xf32, #tpu.memory_space<vmem>>, vector<1x8x128xf32>,
    %c3_i32 = arith.constant 3 : i32
    %c8_i32_38 = arith.constant 8 : i32
    %118 = arith.muli %c3_i32, %c8_i32_38 : i32
    %119 = tpu.assume_multiple %118, 8 : i32
    %120 = arith.index_cast %119 : i32 to index
    %c0_39 = arith.constant 0 : index
    %121 = vector.load %arg10[%120, %c0_39] : memref<64x512xf32, #tpu.memory_space<vmem>>, vector<8x512xf32>
    %cst_40 = arith.constant dense<0.000000e+00> : vector<8x512xf32>
    %122 = tpu.matmul %113, %10, %cst_40 {dimension_numbers = #tpu.dot_dimension_numbers<[1], [0], [0], [1], [0, 0, 1, 1], [], []>} : vector<8x128xf32>, vector<128x512xf32>, vector<8x512xf32> -> vector<8x512xf32>
    %123 = arith.addf %121, %122 : vector<8x512xf32>
    %124 = vector.extract_strided_slice %123 {offsets = [0, 0], sizes = [8, 128], strides = [1, 1]} : vector<8x512xf32> to vector<8x128xf32>
    %125 = arith.negf %124 : vector<8x128xf32>
    %126 = math.exp %125 : vector<8x128xf32>
    %cst_41 = arith.constant 1.000000e+00 : f32
    %127 = vector.broadcast %cst_41 : f32 to vector<8x128xf32>
    %128 = arith.addf %127, %126 : vector<8x128xf32>
    %129 = arith.divf %127, %128 : vector<8x128xf32>
    %130 = vector.extract_strided_slice %123 {offsets = [0, 128], sizes = [8, 128], strides = [1, 1]} : vector<8x512xf32> to vector<8x128xf32>
    %131 = arith.negf %130 : vector<8x128xf32>
    %132 = math.exp %131 : vector<8x128xf32>
    %cst_42 = arith.constant 1.000000e+00 : f32
    %133 = vector.broadcast %cst_42 : f32 to vector<8x128xf32>
    %134 = arith.addf %133, %132 : vector<8x128xf32>
    %135 = arith.divf %133, %134 : vector<8x128xf32>
    %136 = vector.extract_strided_slice %123 {offsets = [0, 256], sizes = [8, 128], strides = [1, 1]} : vector<8x512xf32> to vector<8x128xf32>
    %137 = math.tanh %136 : vector<8x128xf32>
    %138 = vector.extract_strided_slice %123 {offsets = [0, 384], sizes = [8, 128], strides = [1, 1]} : vector<8x512xf32> to vector<8x128xf32>
    %139 = arith.negf %138 : vector<8x128xf32>
    %140 = math.exp %139 : vector<8x128xf32>
    %cst_43 = arith.constant 1.000000e+00 : f32
    %141 = vector.broadcast %cst_43 : f32 to vector<8x128xf32>
    %142 = arith.addf %141, %140 : vector<8x128xf32>
    %143 = arith.divf %141, %142 : vector<8x128xf32>
    %144 = arith.mulf %135, %111 : vector<8x128xf32>
    %145 = arith.mulf %129, %137 : vector<8x128xf32>
    %146 = arith.addf %144, %145 : vector<8x128xf32>
    %147 = math.tanh %146 : vector<8x128xf32>
    %148 = arith.mulf %143, %147 : vector<8x128xf32>
    %149 = arith.index_cast %c3_i32 : i32 to index
    %c0_44 = arith.constant 0 : index
    %c0_45 = arith.constant 0 : index
    %150 = vector.load %arg7[%149, %c0_44, %c0_45] : memref<8x8x128xf32, #tpu.memory_space<vmem>>, vector<1x8x128xf32>
    %151 = vector.shape_cast %150 : vector<1x8x128xf32> to vector<8x128xf32>
    %152 = vector.shape_cast %148 : vector<8x128xf32> to vector<1x8x128xf32>
    tpu.vector_store %arg7[%149, %c0_44, %c0_45], %152 {strides = array<i32>} : memref<8x8x128xf32, #tpu.memory_space<vmem>>, vector<1x8x128xf32>,
    %c4_i32 = arith.constant 4 : i32
    %c8_i32_46 = arith.constant 8 : i32
    %153 = arith.muli %c4_i32, %c8_i32_46 : i32
    %154 = tpu.assume_multiple %153, 8 : i32
    %155 = arith.index_cast %154 : i32 to index
    %c0_47 = arith.constant 0 : index
    %156 = vector.load %arg10[%155, %c0_47] : memref<64x512xf32, #tpu.memory_space<vmem>>, vector<8x512xf32>
    %cst_48 = arith.constant dense<0.000000e+00> : vector<8x512xf32>
    %157 = tpu.matmul %148, %10, %cst_48 {dimension_numbers = #tpu.dot_dimension_numbers<[1], [0], [0], [1], [0, 0, 1, 1], [], []>} : vector<8x128xf32>, vector<128x512xf32>, vector<8x512xf32> -> vector<8x512xf32>
    %158 = arith.addf %156, %157 : vector<8x512xf32>
    %159 = vector.extract_strided_slice %158 {offsets = [0, 0], sizes = [8, 128], strides = [1, 1]} : vector<8x512xf32> to vector<8x128xf32>
    %160 = arith.negf %159 : vector<8x128xf32>
    %161 = math.exp %160 : vector<8x128xf32>
    %cst_49 = arith.constant 1.000000e+00 : f32
    %162 = vector.broadcast %cst_49 : f32 to vector<8x128xf32>
    %163 = arith.addf %162, %161 : vector<8x128xf32>
    %164 = arith.divf %162, %163 : vector<8x128xf32>
    %165 = vector.extract_strided_slice %158 {offsets = [0, 128], sizes = [8, 128], strides = [1, 1]} : vector<8x512xf32> to vector<8x128xf32>
    %166 = arith.negf %165 : vector<8x128xf32>
    %167 = math.exp %166 : vector<8x128xf32>
    %cst_50 = arith.constant 1.000000e+00 : f32
    %168 = vector.broadcast %cst_50 : f32 to vector<8x128xf32>
    %169 = arith.addf %168, %167 : vector<8x128xf32>
    %170 = arith.divf %168, %169 : vector<8x128xf32>
    %171 = vector.extract_strided_slice %158 {offsets = [0, 256], sizes = [8, 128], strides = [1, 1]} : vector<8x512xf32> to vector<8x128xf32>
    %172 = math.tanh %171 : vector<8x128xf32>
    %173 = vector.extract_strided_slice %158 {offsets = [0, 384], sizes = [8, 128], strides = [1, 1]} : vector<8x512xf32> to vector<8x128xf32>
    %174 = arith.negf %173 : vector<8x128xf32>
    %175 = math.exp %174 : vector<8x128xf32>
    %cst_51 = arith.constant 1.000000e+00 : f32
    %176 = vector.broadcast %cst_51 : f32 to vector<8x128xf32>
    %177 = arith.addf %176, %175 : vector<8x128xf32>
    %178 = arith.divf %176, %177 : vector<8x128xf32>
    %179 = arith.mulf %170, %146 : vector<8x128xf32>
    %180 = arith.mulf %164, %172 : vector<8x128xf32>
    %181 = arith.addf %179, %180 : vector<8x128xf32>
    %182 = math.tanh %181 : vector<8x128xf32>
    %183 = arith.mulf %178, %182 : vector<8x128xf32>
    %184 = arith.index_cast %c4_i32 : i32 to index
    %c0_52 = arith.constant 0 : index
    %c0_53 = arith.constant 0 : index
    %185 = vector.load %arg7[%184, %c0_52, %c0_53] : memref<8x8x128xf32, #tpu.memory_space<vmem>>, vector<1x8x128xf32>
    %186 = vector.shape_cast %185 : vector<1x8x128xf32> to vector<8x128xf32>
    %187 = vector.shape_cast %183 : vector<8x128xf32> to vector<1x8x128xf32>
    tpu.vector_store %arg7[%184, %c0_52, %c0_53], %187 {strides = array<i32>} : memref<8x8x128xf32, #tpu.memory_space<vmem>>, vector<1x8x128xf32>,
    %c5_i32 = arith.constant 5 : i32
    %c8_i32_54 = arith.constant 8 : i32
    %188 = arith.muli %c5_i32, %c8_i32_54 : i32
    %189 = tpu.assume_multiple %188, 8 : i32
    %190 = arith.index_cast %189 : i32 to index
    %c0_55 = arith.constant 0 : index
    %191 = vector.load %arg10[%190, %c0_55] : memref<64x512xf32, #tpu.memory_space<vmem>>, vector<8x512xf32>
    %cst_56 = arith.constant dense<0.000000e+00> : vector<8x512xf32>
    %192 = tpu.matmul %183, %10, %cst_56 {dimension_numbers = #tpu.dot_dimension_numbers<[1], [0], [0], [1], [0, 0, 1, 1], [], []>} : vector<8x128xf32>, vector<128x512xf32>, vector<8x512xf32> -> vector<8x512xf32>
    %193 = arith.addf %191, %192 : vector<8x512xf32>
    %194 = vector.extract_strided_slice %193 {offsets = [0, 0], sizes = [8, 128], strides = [1, 1]} : vector<8x512xf32> to vector<8x128xf32>
    %195 = arith.negf %194 : vector<8x128xf32>
    %196 = math.exp %195 : vector<8x128xf32>
    %cst_57 = arith.constant 1.000000e+00 : f32
    %197 = vector.broadcast %cst_57 : f32 to vector<8x128xf32>
    %198 = arith.addf %197, %196 : vector<8x128xf32>
    %199 = arith.divf %197, %198 : vector<8x128xf32>
    %200 = vector.extract_strided_slice %193 {offsets = [0, 128], sizes = [8, 128], strides = [1, 1]} : vector<8x512xf32> to vector<8x128xf32>
    %201 = arith.negf %200 : vector<8x128xf32>
    %202 = math.exp %201 : vector<8x128xf32>
    %cst_58 = arith.constant 1.000000e+00 : f32
    %203 = vector.broadcast %cst_58 : f32 to vector<8x128xf32>
    %204 = arith.addf %203, %202 : vector<8x128xf32>
    %205 = arith.divf %203, %204 : vector<8x128xf32>
    %206 = vector.extract_strided_slice %193 {offsets = [0, 256], sizes = [8, 128], strides = [1, 1]} : vector<8x512xf32> to vector<8x128xf32>
    %207 = math.tanh %206 : vector<8x128xf32>
    %208 = vector.extract_strided_slice %193 {offsets = [0, 384], sizes = [8, 128], strides = [1, 1]} : vector<8x512xf32> to vector<8x128xf32>
    %209 = arith.negf %208 : vector<8x128xf32>
    %210 = math.exp %209 : vector<8x128xf32>
    %cst_59 = arith.constant 1.000000e+00 : f32
    %211 = vector.broadcast %cst_59 : f32 to vector<8x128xf32>
    %212 = arith.addf %211, %210 : vector<8x128xf32>
    %213 = arith.divf %211, %212 : vector<8x128xf32>
    %214 = arith.mulf %205, %181 : vector<8x128xf32>
    %215 = arith.mulf %199, %207 : vector<8x128xf32>
    %216 = arith.addf %214, %215 : vector<8x128xf32>
    %217 = math.tanh %216 : vector<8x128xf32>
    %218 = arith.mulf %213, %217 : vector<8x128xf32>
    %219 = arith.index_cast %c5_i32 : i32 to index
    %c0_60 = arith.constant 0 : index
    %c0_61 = arith.constant 0 : index
    %220 = vector.load %arg7[%219, %c0_60, %c0_61] : memref<8x8x128xf32, #tpu.memory_space<vmem>>, vector<1x8x128xf32>
    %221 = vector.shape_cast %220 : vector<1x8x128xf32> to vector<8x128xf32>
    %222 = vector.shape_cast %218 : vector<8x128xf32> to vector<1x8x128xf32>
    tpu.vector_store %arg7[%219, %c0_60, %c0_61], %222 {strides = array<i32>} : memref<8x8x128xf32, #tpu.memory_space<vmem>>, vector<1x8x128xf32>,
    %c6_i32 = arith.constant 6 : i32
    %c8_i32_62 = arith.constant 8 : i32
    %223 = arith.muli %c6_i32, %c8_i32_62 : i32
    %224 = tpu.assume_multiple %223, 8 : i32
    %225 = arith.index_cast %224 : i32 to index
    %c0_63 = arith.constant 0 : index
    %226 = vector.load %arg10[%225, %c0_63] : memref<64x512xf32, #tpu.memory_space<vmem>>, vector<8x512xf32>
    %cst_64 = arith.constant dense<0.000000e+00> : vector<8x512xf32>
    %227 = tpu.matmul %218, %10, %cst_64 {dimension_numbers = #tpu.dot_dimension_numbers<[1], [0], [0], [1], [0, 0, 1, 1], [], []>} : vector<8x128xf32>, vector<128x512xf32>, vector<8x512xf32> -> vector<8x512xf32>
    %228 = arith.addf %226, %227 : vector<8x512xf32>
    %229 = vector.extract_strided_slice %228 {offsets = [0, 0], sizes = [8, 128], strides = [1, 1]} : vector<8x512xf32> to vector<8x128xf32>
    %230 = arith.negf %229 : vector<8x128xf32>
    %231 = math.exp %230 : vector<8x128xf32>
    %cst_65 = arith.constant 1.000000e+00 : f32
    %232 = vector.broadcast %cst_65 : f32 to vector<8x128xf32>
    %233 = arith.addf %232, %231 : vector<8x128xf32>
    %234 = arith.divf %232, %233 : vector<8x128xf32>
    %235 = vector.extract_strided_slice %228 {offsets = [0, 128], sizes = [8, 128], strides = [1, 1]} : vector<8x512xf32> to vector<8x128xf32>
    %236 = arith.negf %235 : vector<8x128xf32>
    %237 = math.exp %236 : vector<8x128xf32>
    %cst_66 = arith.constant 1.000000e+00 : f32
    %238 = vector.broadcast %cst_66 : f32 to vector<8x128xf32>
    %239 = arith.addf %238, %237 : vector<8x128xf32>
    %240 = arith.divf %238, %239 : vector<8x128xf32>
    %241 = vector.extract_strided_slice %228 {offsets = [0, 256], sizes = [8, 128], strides = [1, 1]} : vector<8x512xf32> to vector<8x128xf32>
    %242 = math.tanh %241 : vector<8x128xf32>
    %243 = vector.extract_strided_slice %228 {offsets = [0, 384], sizes = [8, 128], strides = [1, 1]} : vector<8x512xf32> to vector<8x128xf32>
    %244 = arith.negf %243 : vector<8x128xf32>
    %245 = math.exp %244 : vector<8x128xf32>
    %cst_67 = arith.constant 1.000000e+00 : f32
    %246 = vector.broadcast %cst_67 : f32 to vector<8x128xf32>
    %247 = arith.addf %246, %245 : vector<8x128xf32>
    %248 = arith.divf %246, %247 : vector<8x128xf32>
    %249 = arith.mulf %240, %216 : vector<8x128xf32>
    %250 = arith.mulf %234, %242 : vector<8x128xf32>
    %251 = arith.addf %249, %250 : vector<8x128xf32>
    %252 = math.tanh %251 : vector<8x128xf32>
    %253 = arith.mulf %248, %252 : vector<8x128xf32>
    %254 = arith.index_cast %c6_i32 : i32 to index
    %c0_68 = arith.constant 0 : index
    %c0_69 = arith.constant 0 : index
    %255 = vector.load %arg7[%254, %c0_68, %c0_69] : memref<8x8x128xf32, #tpu.memory_space<vmem>>, vector<1x8x128xf32>
    %256 = vector.shape_cast %255 : vector<1x8x128xf32> to vector<8x128xf32>
    %257 = vector.shape_cast %253 : vector<8x128xf32> to vector<1x8x128xf32>
    tpu.vector_store %arg7[%254, %c0_68, %c0_69], %257 {strides = array<i32>} : memref<8x8x128xf32, #tpu.memory_space<vmem>>, vector<1x8x128xf32>,
    %c7_i32 = arith.constant 7 : i32
    %c8_i32_70 = arith.constant 8 : i32
    %258 = arith.muli %c7_i32, %c8_i32_70 : i32
    %259 = tpu.assume_multiple %258, 8 : i32
    %260 = arith.index_cast %259 : i32 to index
    %c0_71 = arith.constant 0 : index
    %261 = vector.load %arg10[%260, %c0_71] : memref<64x512xf32, #tpu.memory_space<vmem>>, vector<8x512xf32>
    %cst_72 = arith.constant dense<0.000000e+00> : vector<8x512xf32>
    %262 = tpu.matmul %253, %10, %cst_72 {dimension_numbers = #tpu.dot_dimension_numbers<[1], [0], [0], [1], [0, 0, 1, 1], [], []>} : vector<8x128xf32>, vector<128x512xf32>, vector<8x512xf32> -> vector<8x512xf32>
    %263 = arith.addf %261, %262 : vector<8x512xf32>
    %264 = vector.extract_strided_slice %263 {offsets = [0, 0], sizes = [8, 128], strides = [1, 1]} : vector<8x512xf32> to vector<8x128xf32>
    %265 = arith.negf %264 : vector<8x128xf32>
    %266 = math.exp %265 : vector<8x128xf32>
    %cst_73 = arith.constant 1.000000e+00 : f32
    %267 = vector.broadcast %cst_73 : f32 to vector<8x128xf32>
    %268 = arith.addf %267, %266 : vector<8x128xf32>
    %269 = arith.divf %267, %268 : vector<8x128xf32>
    %270 = vector.extract_strided_slice %263 {offsets = [0, 128], sizes = [8, 128], strides = [1, 1]} : vector<8x512xf32> to vector<8x128xf32>
    %271 = arith.negf %270 : vector<8x128xf32>
    %272 = math.exp %271 : vector<8x128xf32>
    %cst_74 = arith.constant 1.000000e+00 : f32
    %273 = vector.broadcast %cst_74 : f32 to vector<8x128xf32>
    %274 = arith.addf %273, %272 : vector<8x128xf32>
    %275 = arith.divf %273, %274 : vector<8x128xf32>
    %276 = vector.extract_strided_slice %263 {offsets = [0, 256], sizes = [8, 128], strides = [1, 1]} : vector<8x512xf32> to vector<8x128xf32>
    %277 = math.tanh %276 : vector<8x128xf32>
    %278 = vector.extract_strided_slice %263 {offsets = [0, 384], sizes = [8, 128], strides = [1, 1]} : vector<8x512xf32> to vector<8x128xf32>
    %279 = arith.negf %278 : vector<8x128xf32>
    %280 = math.exp %279 : vector<8x128xf32>
    %cst_75 = arith.constant 1.000000e+00 : f32
    %281 = vector.broadcast %cst_75 : f32 to vector<8x128xf32>
    %282 = arith.addf %281, %280 : vector<8x128xf32>
    %283 = arith.divf %281, %282 : vector<8x128xf32>
    %284 = arith.mulf %275, %251 : vector<8x128xf32>
    %285 = arith.mulf %269, %277 : vector<8x128xf32>
    %286 = arith.addf %284, %285 : vector<8x128xf32>
    %287 = math.tanh %286 : vector<8x128xf32>
    %288 = arith.mulf %283, %287 : vector<8x128xf32>
    %289 = arith.index_cast %c7_i32 : i32 to index
    %c0_76 = arith.constant 0 : index
    %c0_77 = arith.constant 0 : index
    %290 = vector.load %arg7[%289, %c0_76, %c0_77] : memref<8x8x128xf32, #tpu.memory_space<vmem>>, vector<1x8x128xf32>
    %291 = vector.shape_cast %290 : vector<1x8x128xf32> to vector<8x128xf32>
    %292 = vector.shape_cast %288 : vector<8x128xf32> to vector<1x8x128xf32>
    tpu.vector_store %arg7[%289, %c0_76, %c0_77], %292 {strides = array<i32>} : memref<8x8x128xf32, #tpu.memory_space<vmem>>, vector<1x8x128xf32>,
    %c8_i32_78 = arith.constant 8 : i32
    %c0_79 = arith.constant 0 : index
    %c0_80 = arith.constant 0 : index
    %293 = vector.load %arg8[%c0_79, %c0_80] : memref<8x128xf32, #tpu.memory_space<vmem>>, vector<8x128xf32>
    tpu.vector_store %arg8[%c0_79, %c0_80], %288 {strides = array<i32>} : memref<8x128xf32, #tpu.memory_space<vmem>>, vector<8x128xf32>,
    %c0_81 = arith.constant 0 : index
    %c0_82 = arith.constant 0 : index
    %294 = vector.load %arg9[%c0_81, %c0_82] : memref<8x128xf32, #tpu.memory_space<vmem>>, vector<8x128xf32>
    tpu.vector_store %arg9[%c0_81, %c0_82], %286 {strides = array<i32>} : memref<8x128xf32, #tpu.memory_space<vmem>>, vector<8x128xf32>,
    return
  }
  func.func @transform_0(%arg0: i32) -> (i32, i32) {
    %c0_i32 = arith.constant 0 : i32
    %c0_i32_0 = arith.constant 0 : i32
    return %arg0, %c0_i32 : i32, i32
  }
  func.func @transform_1(%arg0: i32) -> (i32, i32) {
    %c0_i32 = arith.constant 0 : i32
    %c0_i32_0 = arith.constant 0 : i32
    %c0_i32_1 = arith.constant 0 : i32
    return %c0_i32, %c0_i32_0 : i32, i32
  }
  func.func @transform_2(%arg0: i32) -> (i32, i32) {
    %c0_i32 = arith.constant 0 : i32
    %c0_i32_0 = arith.constant 0 : i32
    %c0_i32_1 = arith.constant 0 : i32
    return %c0_i32, %c0_i32_0 : i32, i32
  }
  func.func @transform_3(%arg0: i32) -> (i32, i32) {
    %c0_i32 = arith.constant 0 : i32
    %c0_i32_0 = arith.constant 0 : i32
    %c0_i32_1 = arith.constant 0 : i32
    return %c0_i32, %c0_i32_0 : i32, i32
  }
  func.func @transform_4(%arg0: i32) -> (i32, i32) {
    %c0_i32 = arith.constant 0 : i32
    %c0_i32_0 = arith.constant 0 : i32
    %c0_i32_1 = arith.constant 0 : i32
    return %c0_i32, %c0_i32_0 : i32, i32
  }
  func.func @transform_5(%arg0: i32) -> (i32, i32) {
    %c0_i32 = arith.constant 0 : i32
    %c0_i32_0 = arith.constant 0 : i32
    %c0_i32_1 = arith.constant 0 : i32
    return %c0_i32, %c0_i32_0 : i32, i32
  }
  func.func @transform_6(%arg0: i32) -> (i32, i32, i32) {
    %c0_i32 = arith.constant 0 : i32
    %c0_i32_0 = arith.constant 0 : i32
    %c0_i32_1 = arith.constant 0 : i32
    return %arg0, %c0_i32, %c0_i32_0 : i32, i32, i32
  }
  func.func @transform_7(%arg0: i32) -> (i32, i32) {
    %c0_i32 = arith.constant 0 : i32
    %c0_i32_0 = arith.constant 0 : i32
    %c0_i32_1 = arith.constant 0 : i32
    return %c0_i32, %c0_i32_0 : i32, i32
  }
  func.func @transform_8(%arg0: i32) -> (i32, i32) {
    %c0_i32 = arith.constant 0 : i32
    %c0_i32_0 = arith.constant 0 : i32
    %c0_i32_1 = arith.constant 0 : i32
    return %c0_i32, %c0_i32_0 : i32, i32
  }
}

</mosaic_0001>

<llo_original>
// kernel: tpu_custom_call.1
$region0: #{tpu_custom_call.1}
  #allocation0 [shape = 'u32[]', space=smem, size = 0x4, offset = 0x4, fixed_abs, tag = 'smem constant byte address 0x4 - core index']
  #allocation1 [shape = 'u32[72,128]{1,0:T(1,128)}', space=vmem, size = 0x9000, scoped, tag = 'internal scratch']
  #allocation2 [shape = 'f32[64,512]{1,0:T(8,128)}', space=vmem, size = 0x20000, scoped, tag = 'scratch operand']
  %s0 = inlined_call_operand.hbm [shape: f32[128,128], index: 0, kind: input, shape index: {}]
  %s1 = inlined_call_operand.hbm [shape: f32[128,512], index: 1, kind: input, shape index: {}]
  %s2 = inlined_call_operand.hbm [shape: f32[128,512], index: 2, kind: input, shape index: {}]
  %s3 = inlined_call_operand.hbm [shape: f32[1,512], index: 3, kind: input, shape index: {}]
  %s4 = inlined_call_operand.hbm [shape: f32[8,128], index: 4, kind: input, shape index: {}]
  %s5 = inlined_call_operand.hbm [shape: f32[8,128], index: 5, kind: input, shape index: {}]
  %s6 = inlined_call_operand.hbm [shape: f32[16,8,128], index: 6, kind: output, shape index: {0}]
  %s7 = inlined_call_operand.hbm [shape: f32[8,128], index: 7, kind: output, shape index: {1}]
  %s8 = inlined_call_operand.hbm [shape: f32[8,128], index: 8, kind: output, shape index: {2}]
  %9 = xla_tuple %s6, %s7, %s8
  %s10 = sld [smem:[#allocation0]]
  $region101: #{tpu_custom_call.1} parent=0
    _
  %s12 = ssub.s32 1, %s10
  %s13 = scalar_select 0, %s12, %s10
  $region1: #{tpu_custom_call.1} parent=0
    #allocation3 [shape = 'u8[65536]{0}', space=vmem, size = 0x10000, scoped, tag = 'input window, operand 0']
    #allocation4 [shape = 's32[2]{0}', space=sflag, size = 0x8, scoped, tag = 'scoped memory for tpu_custom_call.1']
    #allocation5 [shape = 's32[2]{0}', space=sflag, size = 0x8, scoped, tag = 'scoped memory for tpu_custom_call.1']
    #allocation6 [shape = 'u8[262144]{0}', space=vmem, size = 0x40000, scoped, tag = 'input window, operand 1, single buffered']
    #allocation7 [shape = 's32[1]{0}', space=sflag, size = 0x4, scoped, tag = 'scoped memory for tpu_custom_call.1']
    #allocation8 [shape = 'u8[262144]{0}', space=vmem, size = 0x40000, scoped, tag = 'input window, operand 2, single buffered']
    #allocation9 [shape = 'u8[2048]{0}', space=vmem, size = 0x800, scoped, tag = 'input window, operand 3, single buffered']
    #allocation10 [shape = 's32[1]{0}', space=sflag, size = 0x4, scoped, tag = 'scoped memory for tpu_custom_call.1']
    #allocation11 [shape = 'u8[4096]{0}', space=vmem, size = 0x1000, scoped, tag = 'input window, operand 4, single buffered']
    #allocation12 [shape = 'u8[4096]{0}', space=vmem, size = 0x1000, scoped, tag = 'input window, operand 5, single buffered']
    #allocation13 [shape = 's32[1]{0}', space=sflag, size = 0x4, scoped, tag = 'scoped memory for tpu_custom_call.1']
    #allocation14 [shape = 'u8[65536]{0}', space=vmem, size = 0x10000, scoped, tag = 'output window, operand 0']
    #allocation15 [shape = 'u8[4096]{0}', space=vmem, size = 0x1000, scoped, tag = 'output window, operand 1, single buffered']
    #allocation16 [shape = 's32[1]{0}', space=sflag, size = 0x4, scoped, tag = 'scoped memory for tpu_custom_call.1']
    #allocation17 [shape = 'u8[4096]{0}', space=vmem, size = 0x1000, scoped, tag = 'output window, operand 2, single buffered']
    %14 = vsyncpa [#allocation4], 0
    %s15 = scalar_lea.sflag [#allocation4], 1
    %16 = vsyncpa %s15, 0
    %17 = vsyncpa [#allocation7], 0
    %18 = vsyncpa [#allocation10], 0
    %19 = vsyncpa [#allocation13], 0
    %20 = vsyncpa [#allocation5], 0
    %s21 = scalar_lea.sflag [#allocation5], 1
    %22 = vsyncpa %s21, 0
    %23 = vsyncpa [#allocation16], 0
    loop: start=0, step=1, limit=4
    $region2: #{tpu_custom_call.1} parent=1 // loop_pre_header
      _
    $region3: #{tpu_custom_call.1} parent=1 // loop_header
      %s25 = sphi 0, %s29
      %p26 = scmp.ge.s32.totalorder %s25, 4
      %s35 = sphi 0, %s37
      %s38 = sphi 0, %s35
      %s39 = sphi 0, %s38
      %s55 = sphi 0, %s39
      %s59 = sphi 0, %s59
      %s61 = sphi 0, %s59
      %s62 = sphi 0, %s61
      %s76 = sphi 0, %s62
      %s80 = sphi 0, %s80
      %s82 = sphi 0, %s80
      %s83 = sphi 0, %s82
      %s97 = sphi 0, %s83
      %s101 = sphi 0, %s101
      %s103 = sphi 0, %s101
      %s104 = sphi 0, %s103
      %s118 = sphi 0, %s104
      %s122 = sphi 0, %s122
      %s124 = sphi 0, %s122
      %s125 = sphi 0, %s124
      %s139 = sphi 0, %s125
      %s143 = sphi 0, %s143
      %s145 = sphi 0, %s143
      %s146 = sphi 0, %s145
      %s160 = sphi 0, %s146
      %s166 = sphi 0, %s168
      %s169 = sphi 0, %s166
      %s170 = sphi 0, %s169
      %s186 = sphi 0, %s170
      %s190 = sphi 0, %s190
      %s192 = sphi 0, %s190
      %s193 = sphi 0, %s192
      %s207 = sphi 0, %s193
      %s211 = sphi 0, %s211
      %s213 = sphi 0, %s211
      %s214 = sphi 0, %s213
      %s228 = sphi 0, %s214
    $region4: #{tpu_custom_call.1} parent=1 // loop_header_branch
      %28 = sbr.rel (%p26) target = $region8
    $region5: #{tpu_custom_call.1} parent=1 // loop_body
      %s30 = ssub.s32 %s25, 1
      %s31 = ssub.s32 %s25, 2
      %s32 = sadd.s32 %s25, 1
      %s33 = ssub.s32 %s25, %s32
      %p34 = scmp.eq.s32.totalorder %s33, 0
      %s36 = sadd.s32 %s35, 1
      %s37 = scalar_select %p34, %s35, %s36
      %p40 = pneg %p34
      %p41 = scmp.eq.s32.totalorder %s25, 1
      %p42 = por %p40, %p41
      %p43 = scmp.ne.s32.totalorder %s35, %s38
      %p44 = scmp.eq.s32.totalorder %s25, 0
      %p45 = por %p43, %p44
      %p46 = scmp.ne.s32.totalorder %s35, %s38
      %p47 = scmp.eq.s32.totalorder %s30, 1
      %p48 = por %p46, %p47
      %p49 = scmp.ne.s32.totalorder %s38, %s39
      %p50 = scmp.eq.s32.totalorder %s30, 0
      %p51 = por %p49, %p50
      %p52 = scmp.ne.s32.totalorder %s38, %s39
      %p53 = scmp.eq.s32.totalorder %s31, 1
      %p54 = por %p52, %p53
      %p56 = scmp.ne.s32.totalorder %s39, %s55
      %p57 = scmp.eq.s32.totalorder %s31, 0
      %p58 = por %p56, %p57
      %s60 = sadd.s32 %s59, 1
      %p63 = scmp.eq.s32.totalorder %s25, 1
      %p64 = scmp.ne.s32.totalorder %s59, %s61
      %p65 = scmp.eq.s32.totalorder %s25, 0
      %p66 = por %p64, %p65
      %p67 = scmp.ne.s32.totalorder %s59, %s61
      %p68 = scmp.eq.s32.totalorder %s30, 1
      %p69 = por %p67, %p68
      %p70 = scmp.ne.s32.totalorder %s61, %s62
      %p71 = scmp.eq.s32.totalorder %s30, 0
      %p72 = por %p70, %p71
      %p73 = scmp.ne.s32.totalorder %s61, %s62
      %p74 = scmp.eq.s32.totalorder %s31, 1
      %p75 = por %p73, %p74
      %p77 = scmp.ne.s32.totalorder %s62, %s76
      %p78 = scmp.eq.s32.totalorder %s31, 0
      %p79 = por %p77, %p78
      %s81 = sadd.s32 %s80, 1
      %p84 = scmp.eq.s32.totalorder %s25, 1
      %p85 = scmp.ne.s32.totalorder %s80, %s82
      %p86 = scmp.eq.s32.totalorder %s25, 0
      %p87 = por %p85, %p86
      %p88 = scmp.ne.s32.totalorder %s80, %s82
      %p89 = scmp.eq.s32.totalorder %s30, 1
      %p90 = por %p88, %p89
      %p91 = scmp.ne.s32.totalorder %s82, %s83
      %p92 = scmp.eq.s32.totalorder %s30, 0
      %p93 = por %p91, %p92
      %p94 = scmp.ne.s32.totalorder %s82, %s83
      %p95 = scmp.eq.s32.totalorder %s31, 1
      %p96 = por %p94, %p95
      %p98 = scmp.ne.s32.totalorder %s83, %s97
      %p99 = scmp.eq.s32.totalorder %s31, 0
      %p100 = por %p98, %p99
      %s102 = sadd.s32 %s101, 1
      %p105 = scmp.eq.s32.totalorder %s25, 1
      %p106 = scmp.ne.s32.totalorder %s101, %s103
      %p107 = scmp.eq.s32.totalorder %s25, 0
      %p108 = por %p106, %p107
      %p109 = scmp.ne.s32.totalorder %s101, %s103
      %p110 = scmp.eq.s32.totalorder %s30, 1
      %p111 = por %p109, %p110
      %p112 = scmp.ne.s32.totalorder %s103, %s104
      %p113 = scmp.eq.s32.totalorder %s30, 0
      %p114 = por %p112, %p113
      %p115 = scmp.ne.s32.totalorder %s103, %s104
      %p116 = scmp.eq.s32.totalorder %s31, 1
      %p117 = por %p115, %p116
      %p119 = scmp.ne.s32.totalorder %s104, %s118
      %p120 = scmp.eq.s32.totalorder %s31, 0
      %p121 = por %p119, %p120
      %s123 = sadd.s32 %s122, 1
      %p126 = scmp.eq.s32.totalorder %s25, 1
      %p127 = scmp.ne.s32.totalorder %s122, %s124
      %p128 = scmp.eq.s32.totalorder %s25, 0
      %p129 = por %p127, %p128
      %p130 = scmp.ne.s32.totalorder %s122, %s124
      %p131 = scmp.eq.s32.totalorder %s30, 1
      %p132 = por %p130, %p131
      %p133 = scmp.ne.s32.totalorder %s124, %s125
      %p134 = scmp.eq.s32.totalorder %s30, 0
      %p135 = por %p133, %p134
      %p136 = scmp.ne.s32.totalorder %s124, %s125
      %p137 = scmp.eq.s32.totalorder %s31, 1
      %p138 = por %p136, %p137
      %p140 = scmp.ne.s32.totalorder %s125, %s139
      %p141 = scmp.eq.s32.totalorder %s31, 0
      %p142 = por %p140, %p141
      %s144 = sadd.s32 %s143, 1
      %p147 = scmp.eq.s32.totalorder %s25, 1
      %p148 = scmp.ne.s32.totalorder %s143, %s145
      %p149 = scmp.eq.s32.totalorder %s25, 0
      %p150 = por %p148, %p149
      %p151 = scmp.ne.s32.totalorder %s143, %s145
      %p152 = scmp.eq.s32.totalorder %s30, 1
      %p153 = por %p151, %p152
      %p154 = scmp.ne.s32.totalorder %s145, %s146
      %p155 = scmp.eq.s32.totalorder %s30, 0
      %p156 = por %p154, %p155
      %p157 = scmp.ne.s32.totalorder %s145, %s146
      %p158 = scmp.eq.s32.totalorder %s31, 1
      %p159 = por %p157, %p158
      %p161 = scmp.ne.s32.totalorder %s146, %s160
      %p162 = scmp.eq.s32.totalorder %s31, 0
      %p163 = por %p161, %p162
      %s164 = ssub.s32 %s25, %s32
      %p165 = scmp.eq.s32.totalorder %s164, 0
      %s167 = sadd.s32 %s166, 1
      %s168 = scalar_select %p165, %s166, %s167
      %p171 = pneg %p165
      %p172 = scmp.eq.s32.totalorder %s25, 1
      %p173 = por %p171, %p172
      %p174 = scmp.ne.s32.totalorder %s166, %s169
      %p175 = scmp.eq.s32.totalorder %s25, 0
      %p176 = por %p174, %p175
      %p177 = scmp.ne.s32.totalorder %s166, %s169
      %p178 = scmp.eq.s32.totalorder %s30, 1
      %p179 = por %p177, %p178
      %p180 = scmp.ne.s32.totalorder %s169, %s170
      %p181 = scmp.eq.s32.totalorder %s30, 0
      %p182 = por %p180, %p181
      %p183 = scmp.ne.s32.totalorder %s169, %s170
      %p184 = scmp.eq.s32.totalorder %s31, 1
      %p185 = por %p183, %p184
      %p187 = scmp.ne.s32.totalorder %s170, %s186
      %p188 = scmp.eq.s32.totalorder %s31, 0
      %p189 = por %p187, %p188
      %s191 = sadd.s32 %s190, 1
      %p194 = scmp.eq.s32.totalorder %s25, 1
      %p195 = scmp.ne.s32.totalorder %s190, %s192
      %p196 = scmp.eq.s32.totalorder %s25, 0
      %p197 = por %p195, %p196
      %p198 = scmp.ne.s32.totalorder %s190, %s192
      %p199 = scmp.eq.s32.totalorder %s30, 1
      %p200 = por %p198, %p199
      %p201 = scmp.ne.s32.totalorder %s192, %s193
      %p202 = scmp.eq.s32.totalorder %s30, 0
      %p203 = por %p201, %p202
      %p204 = scmp.ne.s32.totalorder %s192, %s193
      %p205 = scmp.eq.s32.totalorder %s31, 1
      %p206 = por %p204, %p205
      %p208 = scmp.ne.s32.totalorder %s193, %s207
      %p209 = scmp.eq.s32.totalorder %s31, 0
      %p210 = por %p208, %p209
      %s212 = sadd.s32 %s211, 1
      %p215 = scmp.eq.s32.totalorder %s25, 1
      %p216 = scmp.ne.s32.totalorder %s211, %s213
      %p217 = scmp.eq.s32.totalorder %s25, 0
      %p218 = por %p216, %p217
      %p219 = scmp.ne.s32.totalorder %s211, %s213
      %p220 = scmp.eq.s32.totalorder %s30, 1
      %p221 = por %p219, %p220
      %p222 = scmp.ne.s32.totalorder %s213, %s214
      %p223 = scmp.eq.s32.totalorder %s30, 0
      %p224 = por %p222, %p223
      %p225 = scmp.ne.s32.totalorder %s213, %s214
      %p226 = scmp.eq.s32.totalorder %s31, 1
      %p227 = por %p225, %p226
      %p229 = scmp.ne.s32.totalorder %s214, %s228
      %p230 = scmp.eq.s32.totalorder %s31, 0
      %p231 = por %p229, %p230
      %p232 = scmp.le.s32.totalorder 1, %s25
      %p233 = scmp.lt.s32.totalorder %s25, 3
      %p234 = pnand %p232, %p233
      %p235 = pneg %p234
      // Predicated region
      $region9: #{tpu_custom_call.1} parent=5 // pred_check
        _
      $region10: #{tpu_custom_call.1} parent=5 // pred_check_branch
        %237 = sbr.rel (%p234) target = $region12
      $region11: #{tpu_custom_call.1} parent=5 // pred_region
        %s238 = ssub.s32 %s25, 1
        // Predicated region
        $region13: #{tpu_custom_call.1} parent=11 // pred_check
          %p239 = pneg %p72
        $region14: #{tpu_custom_call.1} parent=11 // pred_check_branch
          %241 = sbr.rel (%p239) target = $region16
        $region15: #{tpu_custom_call.1} parent=11 // pred_region
          %243 = vsyncadd [#allocation7], 0
          %s244 = sshll.u32 %s1, 4
          %s245 = int_to_ptr.hbm [resolvable:$true] %s244
          %s246 = sshll.u32 [#allocation6], 4
          %s247 = int_to_ptr.vmem [resolvable:$true] %s246
          %252 = dma.hbm_to_vmem [thread:$0]  %s245, 8192, %s247, [#allocation7], 512, 512, 32
        $region16: #{tpu_custom_call.1} parent=11 // pred_fallthru
          _
        // Predicated region
        $region17: #{tpu_custom_call.1} parent=11 // pred_check
          %p253 = pneg %p93
        $region18: #{tpu_custom_call.1} parent=11 // pred_check_branch
          %255 = sbr.rel (%p253) target = $region20
        $region19: #{tpu_custom_call.1} parent=11 // pred_region
          %257 = vsyncadd [#allocation7], 0
          %s258 = sshll.u32 %s2, 4
          %s259 = int_to_ptr.hbm [resolvable:$true] %s258
          %s260 = sshll.u32 [#allocation8], 4
          %s261 = int_to_ptr.vmem [resolvable:$true] %s260
          %266 = dma.hbm_to_vmem [thread:$0]  %s259, 8192, %s261, [#allocation7], 512, 512, 32
        $region20: #{tpu_custom_call.1} parent=11 // pred_fallthru
          _
        // Predicated region
        $region21: #{tpu_custom_call.1} parent=11 // pred_check
          %p267 = pneg %p114
        $region22: #{tpu_custom_call.1} parent=11 // pred_check_branch
          %269 = sbr.rel (%p267) target = $region24
        $region23: #{tpu_custom_call.1} parent=11 // pred_region
          %271 = vsyncadd [#allocation10], 0
          %s273 = sshll.u32 %s3, 4
          %s274 = int_to_ptr.hbm [resolvable:$true] %s273
          %s275 = sshll.u32 [#allocation9], 4
          %s276 = int_to_ptr.vmem [resolvable:$true] %s275
          %278 = dma.hbm_to_vmem [thread:$0]  %s274, 64, %s276, [#allocation10]
        $region24: #{tpu_custom_call.1} parent=11 // pred_fallthru
          _
        // Predicated region
        $region25: #{tpu_custom_call.1} parent=11 // pred_check
          %p279 = pneg %p135
        $region26: #{tpu_custom_call.1} parent=11 // pred_check_branch
          %281 = sbr.rel (%p279) target = $region28
        $region27: #{tpu_custom_call.1} parent=11 // pred_region
          %283 = vsyncadd [#allocation10], 0
          %s285 = sshll.u32 %s4, 4
          %s286 = int_to_ptr.hbm [resolvable:$true] %s285
          %s287 = sshll.u32 [#allocation11], 4
          %s288 = int_to_ptr.vmem [resolvable:$true] %s287
          %290 = dma.hbm_to_vmem [thread:$0]  %s286, 128, %s288, [#allocation10]
        $region28: #{tpu_custom_call.1} parent=11 // pred_fallthru
          _
        // Predicated region
        $region29: #{tpu_custom_call.1} parent=11 // pred_check
          %p291 = pneg %p156
        $region30: #{tpu_custom_call.1} parent=11 // pred_check_branch
          %293 = sbr.rel (%p291) target = $region32
        $region31: #{tpu_custom_call.1} parent=11 // pred_region
          %295 = vsyncadd [#allocation13], 0
          %s297 = sshll.u32 %s5, 4
          %s298 = int_to_ptr.hbm [resolvable:$true] %s297
          %s299 = sshll.u32 [#allocation12], 4
          %s300 = int_to_ptr.vmem [resolvable:$true] %s299
          %302 = dma.hbm_to_vmem [thread:$0]  %s298, 128, %s300, [#allocation13]
        $region32: #{tpu_custom_call.1} parent=11 // pred_fallthru
          _
      $region12: #{tpu_custom_call.1} parent=5 // pred_fallthru
        _
      %p303 = scmp.lt.s32.totalorder %s25, 2
      // Predicated region
      $region33: #{tpu_custom_call.1} parent=5 // pred_check
        %p304 = pneg %p303
      $region34: #{tpu_custom_call.1} parent=5 // pred_check_branch
        %306 = sbr.rel (%p304) target = $region36
      $region35: #{tpu_custom_call.1} parent=5 // pred_region
        // Predicated region
        $region37: #{tpu_custom_call.1} parent=35 // pred_check
          %p307 = pneg %p45
        $region38: #{tpu_custom_call.1} parent=35 // pred_check_branch
          %309 = sbr.rel (%p307) target = $region40
        $region39: #{tpu_custom_call.1} parent=35 // pred_region
          %s310 = sand.u32 %s35, 1
          %s311 = scalar_lea.sflag [#allocation4], %s310
          %s312 = sand.u32 %s35, 1
          %s313 = smul.addr %s312, 64
          %s314 = scalar_lea.vmem [#allocation3], %s313
          %s315 = smul.u32 8, %s25
          %317 = vsyncadd %s311, 0
          %s318 = smul.addr %s315, 8
          %s319 = scalar_lea.hbm %s0, %s318
          %s320 = sshll.u32 %s319, 4
          %s321 = int_to_ptr.hbm [resolvable:$true] %s320
          %s322 = sshll.u32 %s314, 4
          %s323 = int_to_ptr.vmem [resolvable:$true] %s322
          %328 = dma.hbm_to_vmem [thread:$0]  %s321, 1024, %s323, %s311, 128, 128, 8
        $region40: #{tpu_custom_call.1} parent=35 // pred_fallthru
          _
      $region36: #{tpu_custom_call.1} parent=5 // pred_fallthru
        _
      %p329 = scmp.le.s32.totalorder 1, %s25
      %p330 = scmp.lt.s32.totalorder %s25, 3
      %p331 = pnand %p329, %p330
      %p332 = pneg %p331
      // Predicated region
      $region41: #{tpu_custom_call.1} parent=5 // pred_check
        _
      $region42: #{tpu_custom_call.1} parent=5 // pred_check_branch
        %334 = sbr.rel (%p331) target = $region44
      $region43: #{tpu_custom_call.1} parent=5 // pred_region
        %s335 = ssub.s32 %s25, 1
        %s336 = sand.u32 %s38, 1
        %s337 = scalar_lea.sflag [#allocation4], %s336
        %s338 = sand.u32 %s38, 1
        %s339 = smul.addr %s338, 64
        %s340 = scalar_lea.vmem [#allocation3], %s339
        // Predicated region
        $region45: #{tpu_custom_call.1} parent=43 // pred_check
          %p341 = pneg %p51
        $region46: #{tpu_custom_call.1} parent=43 // pred_check_branch
          %343 = sbr.rel (%p341) target = $region48
        $region47: #{tpu_custom_call.1} parent=43 // pred_region
          %345 = dma.done %s337, 1024
        $region48: #{tpu_custom_call.1} parent=43 // pred_fallthru
          _
        // Predicated region
        $region49: #{tpu_custom_call.1} parent=43 // pred_check
          %p346 = pneg %p72
        $region50: #{tpu_custom_call.1} parent=43 // pred_check_branch
          %348 = sbr.rel (%p346) target = $region52
        $region51: #{tpu_custom_call.1} parent=43 // pred_region
          %350 = dma.done [#allocation7], 8192
        $region52: #{tpu_custom_call.1} parent=43 // pred_fallthru
          _
        // Predicated region
        $region53: #{tpu_custom_call.1} parent=43 // pred_check
          %p351 = pneg %p93
        $region54: #{tpu_custom_call.1} parent=43 // pred_check_branch
          %353 = sbr.rel (%p351) target = $region56
        $region55: #{tpu_custom_call.1} parent=43 // pred_region
          %355 = dma.done [#allocation7], 8192
        $region56: #{tpu_custom_call.1} parent=43 // pred_fallthru
          _
        // Predicated region
        $region57: #{tpu_custom_call.1} parent=43 // pred_check
          %p356 = pneg %p114
        $region58: #{tpu_custom_call.1} parent=43 // pred_check_branch
          %358 = sbr.rel (%p356) target = $region60
        $region59: #{tpu_custom_call.1} parent=43 // pred_region
          %360 = dma.done [#allocation10], 64
        $region60: #{tpu_custom_call.1} parent=43 // pred_fallthru
          _
        // Predicated region
        $region61: #{tpu_custom_call.1} parent=43 // pred_check
          %p361 = pneg %p135
        $region62: #{tpu_custom_call.1} parent=43 // pred_check_branch
          %363 = sbr.rel (%p361) target = $region64
        $region63: #{tpu_custom_call.1} parent=43 // pred_region
          %365 = dma.done [#allocation10], 128
        $region64: #{tpu_custom_call.1} parent=43 // pred_fallthru
          _
        // Predicated region
        $region65: #{tpu_custom_call.1} parent=43 // pred_check
          %p366 = pneg %p156
        $region66: #{tpu_custom_call.1} parent=43 // pred_check_branch
          %368 = sbr.rel (%p366) target = $region68
        $region67: #{tpu_custom_call.1} parent=43 // pred_region
          %370 = dma.done [#allocation13], 128
        $region68: #{tpu_custom_call.1} parent=43 // pred_fallthru
          _
        %s371 = sand.u32 %s38, 1
        %s372 = scalar_lea.sflag [#allocation4], %s371
        %s373 = sand.u32 %s38, 1
        %s374 = smul.addr %s373, 64
        %s375 = scalar_lea.vmem [#allocation3], %s374
        %p376 = pneg %p51
        %p377 = pneg %p48
        %p378 = pneg %p72
        %p379 = pneg %p69
        %p380 = pneg %p93
        %p381 = pneg %p90
        %p382 = pneg %p114
        %p383 = pneg %p111
        %p384 = pneg %p135
        %p385 = pneg %p132
        %p386 = pneg %p156
        %p387 = pneg %p153
        %p388 = pneg %p182
        %p389 = pneg %p179
        %s390 = sand.u32 %s169, 1
        %s391 = scalar_lea.sflag [#allocation5], %s390
        %s392 = sand.u32 %s169, 1
        %s393 = smul.addr %s392, 64
        %s394 = scalar_lea.vmem [#allocation14], %s393
        %p395 = pneg %p203
        %p396 = pneg %p200
        %p397 = pneg %p224
        %p398 = pneg %p221
        %s399 = smul.u32 8, %s30
        %s400 = smul.u32 8, %s30
        %p401 = scmp.eq.s32.totalorder %s30, 0
        // Predicated region
        $region69: #{tpu_custom_call.1} parent=43 // pred_check
          %p402 = pneg %p401
        $region70: #{tpu_custom_call.1} parent=43 // pred_check_branch
          %404 = sbr.rel (%p402) target = $region72
        $region71: #{tpu_custom_call.1} parent=43 // pred_region
          %v405 = vld [vmem:[#allocation11] sm:$0xff]
          %406 = vst [vmem:[#allocation15] sm:$0xff] %v405
          %v407 = vld [vmem:[#allocation12] sm:$0xff]
          %408 = vst [vmem:[#allocation17] sm:$0xff] %v407
        $region72: #{tpu_custom_call.1} parent=43 // pred_fallthru
          _
        %v409 = vld [vmem:[%s340] sm:$0xff]
        %v410 = vld [vmem:[%s340 + $0x8] sm:$0xff]
        %v411 = vld [vmem:[%s340 + $0x10] sm:$0xff]
        %v412 = vld [vmem:[%s340 + $0x18] sm:$0xff]
        %v413 = vld [vmem:[%s340 + $0x20] sm:$0xff]
        %v414 = vld [vmem:[%s340 + $0x28] sm:$0xff]
        %v415 = vld [vmem:[%s340 + $0x30] sm:$0xff]
        %v416 = vld [vmem:[%s340 + $0x38] sm:$0xff]
        %v417 = vld [vmem:[#allocation6] sm:$0xff]
        %v418 = vld [vmem:[#allocation6 + $0x8] sm:$0xff]
        %v419 = vld [vmem:[#allocation6 + $0x10] sm:$0xff]
        %v420 = vld [vmem:[#allocation6 + $0x18] sm:$0xff]
        %v421 = vld [vmem:[#allocation6 + $0x20] sm:$0xff]
        %v422 = vld [vmem:[#allocation6 + $0x28] sm:$0xff]
        %v423 = vld [vmem:[#allocation6 + $0x30] sm:$0xff]
        %v424 = vld [vmem:[#allocation6 + $0x38] sm:$0xff]
        %v425 = vld [vmem:[#allocation6 + $0x40] sm:$0xff]
        %v426 = vld [vmem:[#allocation6 + $0x48] sm:$0xff]
        %v427 = vld [vmem:[#allocation6 + $0x50] sm:$0xff]
        %v428 = vld [vmem:[#allocation6 + $0x58] sm:$0xff]
        %v429 = vld [vmem:[#allocation6 + $0x60] sm:$0xff]
        %v430 = vld [vmem:[#allocation6 + $0x68] sm:$0xff]
        %v431 = vld [vmem:[#allocation6 + $0x70] sm:$0xff]
        %v432 = vld [vmem:[#allocation6 + $0x78] sm:$0xff]
        %v433 = vld [vmem:[#allocation6 + $0x80] sm:$0xff]
        %v434 = vld [vmem:[#allocation6 + $0x88] sm:$0xff]
        %v435 = vld [vmem:[#allocation6 + $0x90] sm:$0xff]
        %v436 = vld [vmem:[#allocation6 + $0x98] sm:$0xff]
        %v437 = vld [vmem:[#allocation6 + $0xa0] sm:$0xff]
        %v438 = vld [vmem:[#allocation6 + $0xa8] sm:$0xff]
        %v439 = vld [vmem:[#allocation6 + $0xb0] sm:$0xff]
        %v440 = vld [vmem:[#allocation6 + $0xb8] sm:$0xff]
        %v441 = vld [vmem:[#allocation6 + $0xc0] sm:$0xff]
        %v442 = vld [vmem:[#allocation6 + $0xc8] sm:$0xff]
        %v443 = vld [vmem:[#allocation6 + $0xd0] sm:$0xff]
        %v444 = vld [vmem:[#allocation6 + $0xd8] sm:$0xff]
        %v445 = vld [vmem:[#allocation6 + $0xe0] sm:$0xff]
        %v446 = vld [vmem:[#allocation6 + $0xe8] sm:$0xff]
        %v447 = vld [vmem:[#allocation6 + $0xf0] sm:$0xff]
        %v448 = vld [vmem:[#allocation6 + $0xf8] sm:$0xff]
        %v449 = vld [vmem:[#allocation6 + $0x100] sm:$0xff]
        %v450 = vld [vmem:[#allocation6 + $0x108] sm:$0xff]
        %v451 = vld [vmem:[#allocation6 + $0x110] sm:$0xff]
        %v452 = vld [vmem:[#allocation6 + $0x118] sm:$0xff]
        %v453 = vld [vmem:[#allocation6 + $0x120] sm:$0xff]
        %v454 = vld [vmem:[#allocation6 + $0x128] sm:$0xff]
        %v455 = vld [vmem:[#allocation6 + $0x130] sm:$0xff]
        %v456 = vld [vmem:[#allocation6 + $0x138] sm:$0xff]
        %v457 = vld [vmem:[#allocation6 + $0x140] sm:$0xff]
        %v458 = vld [vmem:[#allocation6 + $0x148] sm:$0xff]
        %v459 = vld [vmem:[#allocation6 + $0x150] sm:$0xff]
        %v460 = vld [vmem:[#allocation6 + $0x158] sm:$0xff]
        %v461 = vld [vmem:[#allocation6 + $0x160] sm:$0xff]
        %v462 = vld [vmem:[#allocation6 + $0x168] sm:$0xff]
        %v463 = vld [vmem:[#allocation6 + $0x170] sm:$0xff]
        %v464 = vld [vmem:[#allocation6 + $0x178] sm:$0xff]
        %v465 = vld [vmem:[#allocation6 + $0x180] sm:$0xff]
        %v466 = vld [vmem:[#allocation6 + $0x188] sm:$0xff]
        %v467 = vld [vmem:[#allocation6 + $0x190] sm:$0xff]
        %v468 = vld [vmem:[#allocation6 + $0x198] sm:$0xff]
        %v469 = vld [vmem:[#allocation6 + $0x1a0] sm:$0xff]
        %v470 = vld [vmem:[#allocation6 + $0x1a8] sm:$0xff]
        %v471 = vld [vmem:[#allocation6 + $0x1b0] sm:$0xff]
        %v472 = vld [vmem:[#allocation6 + $0x1b8] sm:$0xff]
        %v473 = vld [vmem:[#allocation6 + $0x1c0] sm:$0xff]
        %v474 = vld [vmem:[#allocation6 + $0x1c8] sm:$0xff]
        %v475 = vld [vmem:[#allocation6 + $0x1d0] sm:$0xff]
        %v476 = vld [vmem:[#allocation6 + $0x1d8] sm:$0xff]
        %v477 = vld [vmem:[#allocation6 + $0x1e0] sm:$0xff]
        %v478 = vld [vmem:[#allocation6 + $0x1e8] sm:$0xff]
        %v479 = vld [vmem:[#allocation6 + $0x1f0] sm:$0xff]
        %v480 = vld [vmem:[#allocation6 + $0x1f8] sm:$0xff]
        %v481 = vld [vmem:[#allocation9] sm:$0xf]
        %v483 = vperm.slane %v481, 0
        %v484 = vperm.slane %v481, 1
        %v485 = vperm.slane %v481, 2
        %v486 = vperm.slane %v481, 3
        %491 = vmatpush.msra.mxu0 %v477
        %492 = vmatpush.msra.mxu0 %v473
        %493 = vmatpush.msra.mxu0 %v469
        %494 = vmatpush.msra.mxu0 %v465
        %495 = vmatpush.msra.mxu0 %v461
        %496 = vmatpush.msra.mxu0 %v457
        %497 = vmatpush.msra.mxu0 %v453
        %498 = vmatpush.msra.mxu0 %v449
        %499 = vmatpush.msra.mxu0 %v445
        %500 = vmatpush.msra.mxu0 %v441
        %501 = vmatpush.msra.mxu0 %v437
        %502 = vmatpush.msra.mxu0 %v433
        %503 = vmatpush.msra.mxu0 %v429
        %504 = vmatpush.msra.mxu0 %v425
        %505 = vmatpush.msra.mxu0 %v421
        %506 = vmatpush.msra.mxu0 %v417
        %507 = vmatmul.f32.gmra.mxu0 %v409
        %v508 = vpop.f32.mrf.mxu0
        %v509 = vadd.f32 %v483, %v508
        %510 = vmatmul.f32.gmra.mxu0 %v410
        %v511 = vpop.f32.mrf.mxu0
        %v512 = vadd.f32 %v483, %v511
        %513 = vmatmul.f32.gmra.mxu0 %v411
        %v514 = vpop.f32.mrf.mxu0
        %v515 = vadd.f32 %v483, %v514
        %516 = vmatmul.f32.gmra.mxu0 %v412
        %v517 = vpop.f32.mrf.mxu0
        %v518 = vadd.f32 %v483, %v517
        %519 = vmatmul.f32.gmra.mxu0 %v413
        %v520 = vpop.f32.mrf.mxu0
        %v521 = vadd.f32 %v483, %v520
        %522 = vmatmul.f32.gmra.mxu0 %v414
        %v523 = vpop.f32.mrf.mxu0
        %v524 = vadd.f32 %v483, %v523
        %525 = vmatmul.f32.gmra.mxu0 %v415
        %v526 = vpop.f32.mrf.mxu0
        %v527 = vadd.f32 %v483, %v526
        %528 = vmatmul.f32.gmra.mxu0 %v416
        %v529 = vpop.f32.mrf.mxu0
        %v530 = vadd.f32 %v483, %v529
        %531 = vdwg.mxu0
        %532 = vmatpush.msra.mxu0 %v478
        %533 = vmatpush.msra.mxu0 %v474
        %534 = vmatpush.msra.mxu0 %v470
        %535 = vmatpush.msra.mxu0 %v466
        %536 = vmatpush.msra.mxu0 %v462
        %537 = vmatpush.msra.mxu0 %v458
        %538 = vmatpush.msra.mxu0 %v454
        %539 = vmatpush.msra.mxu0 %v450
        %540 = vmatpush.msra.mxu0 %v446
        %541 = vmatpush.msra.mxu0 %v442
        %542 = vmatpush.msra.mxu0 %v438
        %543 = vmatpush.msra.mxu0 %v434
        %544 = vmatpush.msra.mxu0 %v430
        %545 = vmatpush.msra.mxu0 %v426
        %546 = vmatpush.msra.mxu0 %v422
        %547 = vmatpush.msra.mxu0 %v418
        %548 = vmatmul.f32.gmra.mxu0 %v409
        %v549 = vpop.f32.mrf.mxu0
        %v550 = vadd.f32 %v484, %v549
        %551 = vmatmul.f32.gmra.mxu0 %v410
        %v552 = vpop.f32.mrf.mxu0
        %v553 = vadd.f32 %v484, %v552
        %554 = vmatmul.f32.gmra.mxu0 %v411
        %v555 = vpop.f32.mrf.mxu0
        %v556 = vadd.f32 %v484, %v555
        %557 = vmatmul.f32.gmra.mxu0 %v412
        %v558 = vpop.f32.mrf.mxu0
        %v559 = vadd.f32 %v484, %v558
        %560 = vmatmul.f32.gmra.mxu0 %v413
        %v561 = vpop.f32.mrf.mxu0
        %v562 = vadd.f32 %v484, %v561
        %563 = vmatmul.f32.gmra.mxu0 %v414
        %v564 = vpop.f32.mrf.mxu0
        %v565 = vadd.f32 %v484, %v564
        %566 = vmatmul.f32.gmra.mxu0 %v415
        %v567 = vpop.f32.mrf.mxu0
        %v568 = vadd.f32 %v484, %v567
        %569 = vmatmul.f32.gmra.mxu0 %v416
        %v570 = vpop.f32.mrf.mxu0
        %v571 = vadd.f32 %v484, %v570
        %572 = vdwg.mxu0
        %573 = vmatpush.msra.mxu0 %v479
        %574 = vmatpush.msra.mxu0 %v475
        %575 = vmatpush.msra.mxu0 %v471
        %576 = vmatpush.msra.mxu0 %v467
        %577 = vmatpush.msra.mxu0 %v463
        %578 = vmatpush.msra.mxu0 %v459
        %579 = vmatpush.msra.mxu0 %v455
        %580 = vmatpush.msra.mxu0 %v451
        %581 = vmatpush.msra.mxu0 %v447
        %582 = vmatpush.msra.mxu0 %v443
        %583 = vmatpush.msra.mxu0 %v439
        %584 = vmatpush.msra.mxu0 %v435
        %585 = vmatpush.msra.mxu0 %v431
        %586 = vmatpush.msra.mxu0 %v427
        %587 = vmatpush.msra.mxu0 %v423
        %588 = vmatpush.msra.mxu0 %v419
        %589 = vmatmul.f32.gmra.mxu0 %v409
        %v590 = vpop.f32.mrf.mxu0
        %v591 = vadd.f32 %v485, %v590
        %592 = vmatmul.f32.gmra.mxu0 %v410
        %v593 = vpop.f32.mrf.mxu0
        %v594 = vadd.f32 %v485, %v593
        %595 = vmatmul.f32.gmra.mxu0 %v411
        %v596 = vpop.f32.mrf.mxu0
        %v597 = vadd.f32 %v485, %v596
        %598 = vmatmul.f32.gmra.mxu0 %v412
        %v599 = vpop.f32.mrf.mxu0
        %v600 = vadd.f32 %v485, %v599
        %601 = vmatmul.f32.gmra.mxu0 %v413
        %v602 = vpop.f32.mrf.mxu0
        %v603 = vadd.f32 %v485, %v602
        %604 = vmatmul.f32.gmra.mxu0 %v414
        %v605 = vpop.f32.mrf.mxu0
        %v606 = vadd.f32 %v485, %v605
        %607 = vmatmul.f32.gmra.mxu0 %v415
        %v608 = vpop.f32.mrf.mxu0
        %v609 = vadd.f32 %v485, %v608
        %610 = vmatmul.f32.gmra.mxu0 %v416
        %v611 = vpop.f32.mrf.mxu0
        %v612 = vadd.f32 %v485, %v611
        %613 = vdwg.mxu0
        %614 = vmatpush.msra.mxu0 %v480
        %615 = vmatpush.msra.mxu0 %v476
        %616 = vmatpush.msra.mxu0 %v472
        %617 = vmatpush.msra.mxu0 %v468
        %618 = vmatpush.msra.mxu0 %v464
        %619 = vmatpush.msra.mxu0 %v460
        %620 = vmatpush.msra.mxu0 %v456
        %621 = vmatpush.msra.mxu0 %v452
        %622 = vmatpush.msra.mxu0 %v448
        %623 = vmatpush.msra.mxu0 %v444
        %624 = vmatpush.msra.mxu0 %v440
        %625 = vmatpush.msra.mxu0 %v436
        %626 = vmatpush.msra.mxu0 %v432
        %627 = vmatpush.msra.mxu0 %v428
        %628 = vmatpush.msra.mxu0 %v424
        %629 = vmatpush.msra.mxu0 %v420
        %630 = vmatmul.f32.gmra.mxu0 %v409
        %v631 = vpop.f32.mrf.mxu0
        %v632 = vadd.f32 %v486, %v631
        %633 = vmatmul.f32.gmra.mxu0 %v410
        %v634 = vpop.f32.mrf.mxu0
        %v635 = vadd.f32 %v486, %v634
        %636 = vmatmul.f32.gmra.mxu0 %v411
        %v637 = vpop.f32.mrf.mxu0
        %v638 = vadd.f32 %v486, %v637
        %639 = vmatmul.f32.gmra.mxu0 %v412
        %v640 = vpop.f32.mrf.mxu0
        %v641 = vadd.f32 %v486, %v640
        %642 = vmatmul.f32.gmra.mxu0 %v413
        %v643 = vpop.f32.mrf.mxu0
        %v644 = vadd.f32 %v486, %v643
        %645 = vmatmul.f32.gmra.mxu0 %v414
        %v646 = vpop.f32.mrf.mxu0
        %v647 = vadd.f32 %v486, %v646
        %648 = vmatmul.f32.gmra.mxu0 %v415
        %v649 = vpop.f32.mrf.mxu0
        %v650 = vadd.f32 %v486, %v649
        %651 = vmatmul.f32.gmra.mxu0 %v416
        %v652 = vpop.f32.mrf.mxu0
        %v653 = vadd.f32 %v486, %v652
        %654 = vdwg.mxu0
        %655 = vst [vmem:[#allocation2] sm:$0xff] %v509
        %656 = vst [vmem:[#allocation2 + $0x8] sm:$0xff] %v550
        %657 = vst [vmem:[#allocation2 + $0x10] sm:$0xff] %v591
        %658 = vst [vmem:[#allocation2 + $0x18] sm:$0xff] %v632
        %659 = vst [vmem:[#allocation2 + $0x20] sm:$0xff] %v512
        %660 = vst [vmem:[#allocation2 + $0x28] sm:$0xff] %v553
        %661 = vst [vmem:[#allocation2 + $0x30] sm:$0xff] %v594
        %662 = vst [vmem:[#allocation2 + $0x38] sm:$0xff] %v635
        %663 = vst [vmem:[#allocation2 + $0x40] sm:$0xff] %v515
        %664 = vst [vmem:[#allocation2 + $0x48] sm:$0xff] %v556
        %665 = vst [vmem:[#allocation2 + $0x50] sm:$0xff] %v597
        %666 = vst [vmem:[#allocation2 + $0x58] sm:$0xff] %v638
        %667 = vst [vmem:[#allocation2 + $0x60] sm:$0xff] %v518
        %668 = vst [vmem:[#allocation2 + $0x68] sm:$0xff] %v559
        %669 = vst [vmem:[#allocation2 + $0x70] sm:$0xff] %v600
        %670 = vst [vmem:[#allocation2 + $0x78] sm:$0xff] %v641
        %671 = vst [vmem:[#allocation2 + $0x80] sm:$0xff] %v521
        %672 = vst [vmem:[#allocation2 + $0x88] sm:$0xff] %v562
        %673 = vst [vmem:[#allocation2 + $0x90] sm:$0xff] %v603
        %674 = vst [vmem:[#allocation2 + $0x98] sm:$0xff] %v644
        %675 = vst [vmem:[#allocation2 + $0xa0] sm:$0xff] %v524
        %676 = vst [vmem:[#allocation2 + $0xa8] sm:$0xff] %v565
        %677 = vst [vmem:[#allocation2 + $0xb0] sm:$0xff] %v606
        %678 = vst [vmem:[#allocation2 + $0xb8] sm:$0xff] %v647
        %679 = vst [vmem:[#allocation2 + $0xc0] sm:$0xff] %v527
        %680 = vst [vmem:[#allocation2 + $0xc8] sm:$0xff] %v568
        %681 = vst [vmem:[#allocation2 + $0xd0] sm:$0xff] %v609
        %682 = vst [vmem:[#allocation2 + $0xd8] sm:$0xff] %v650
        %683 = vst [vmem:[#allocation2 + $0xe0] sm:$0xff] %v530
        %684 = vst [vmem:[#allocation2 + $0xe8] sm:$0xff] %v571
        %685 = vst [vmem:[#allocation2 + $0xf0] sm:$0xff] %v612
        %686 = vst [vmem:[#allocation2 + $0xf8] sm:$0xff] %v653
        %v687 = vld [vmem:[#allocation8] sm:$0xff]
        %v688 = vld [vmem:[#allocation8 + $0x8] sm:$0xff]
        %v689 = vld [vmem:[#allocation8 + $0x10] sm:$0xff]
        %v690 = vld [vmem:[#allocation8 + $0x18] sm:$0xff]
        %v691 = vld [vmem:[#allocation8 + $0x20] sm:$0xff]
        %v692 = vld [vmem:[#allocation8 + $0x28] sm:$0xff]
        %v693 = vld [vmem:[#allocation8 + $0x30] sm:$0xff]
        %v694 = vld [vmem:[#allocation8 + $0x38] sm:$0xff]
        %v695 = vld [vmem:[#allocation8 + $0x40] sm:$0xff]
        %v696 = vld [vmem:[#allocation8 + $0x48] sm:$0xff]
        %v697 = vld [vmem:[#allocation8 + $0x50] sm:$0xff]
        %v698 = vld [vmem:[#allocation8 + $0x58] sm:$0xff]
        %v699 = vld [vmem:[#allocation8 + $0x60] sm:$0xff]
        %v700 = vld [vmem:[#allocation8 + $0x68] sm:$0xff]
        %v701 = vld [vmem:[#allocation8 + $0x70] sm:$0xff]
        %v702 = vld [vmem:[#allocation8 + $0x78] sm:$0xff]
        %v703 = vld [vmem:[#allocation8 + $0x80] sm:$0xff]
        %v704 = vld [vmem:[#allocation8 + $0x88] sm:$0xff]
        %v705 = vld [vmem:[#allocation8 + $0x90] sm:$0xff]
        %v706 = vld [vmem:[#allocation8 + $0x98] sm:$0xff]
        %v707 = vld [vmem:[#allocation8 + $0xa0] sm:$0xff]
        %v708 = vld [vmem:[#allocation8 + $0xa8] sm:$0xff]
        %v709 = vld [vmem:[#allocation8 + $0xb0] sm:$0xff]
        %v710 = vld [vmem:[#allocation8 + $0xb8] sm:$0xff]
        %v711 = vld [vmem:[#allocation8 + $0xc0] sm:$0xff]
        %v712 = vld [vmem:[#allocation8 + $0xc8] sm:$0xff]
        %v713 = vld [vmem:[#allocation8 + $0xd0] sm:$0xff]
        %v714 = vld [vmem:[#allocation8 + $0xd8] sm:$0xff]
        %v715 = vld [vmem:[#allocation8 + $0xe0] sm:$0xff]
        %v716 = vld [vmem:[#allocation8 + $0xe8] sm:$0xff]
        %v717 = vld [vmem:[#allocation8 + $0xf0] sm:$0xff]
        %v718 = vld [vmem:[#allocation8 + $0xf8] sm:$0xff]
        %v719 = vld [vmem:[#allocation8 + $0x100] sm:$0xff]
        %v720 = vld [vmem:[#allocation8 + $0x108] sm:$0xff]
        %v721 = vld [vmem:[#allocation8 + $0x110] sm:$0xff]
        %v722 = vld [vmem:[#allocation8 + $0x118] sm:$0xff]
        %v723 = vld [vmem:[#allocation8 + $0x120] sm:$0xff]
        %v724 = vld [vmem:[#allocation8 + $0x128] sm:$0xff]
        %v725 = vld [vmem:[#allocation8 + $0x130] sm:$0xff]
        %v726 = vld [vmem:[#allocation8 + $0x138] sm:$0xff]
        %v727 = vld [vmem:[#allocation8 + $0x140] sm:$0xff]
        %v728 = vld [vmem:[#allocation8 + $0x148] sm:$0xff]
        %v729 = vld [vmem:[#allocation8 + $0x150] sm:$0xff]
        %v730 = vld [vmem:[#allocation8 + $0x158] sm:$0xff]
        %v731 = vld [vmem:[#allocation8 + $0x160] sm:$0xff]
        %v732 = vld [vmem:[#allocation8 + $0x168] sm:$0xff]
        %v733 = vld [vmem:[#allocation8 + $0x170] sm:$0xff]
        %v734 = vld [vmem:[#allocation8 + $0x178] sm:$0xff]
        %v735 = vld [vmem:[#allocation8 + $0x180] sm:$0xff]
        %v736 = vld [vmem:[#allocation8 + $0x188] sm:$0xff]
        %v737 = vld [vmem:[#allocation8 + $0x190] sm:$0xff]
        %v738 = vld [vmem:[#allocation8 + $0x198] sm:$0xff]
        %v739 = vld [vmem:[#allocation8 + $0x1a0] sm:$0xff]
        %v740 = vld [vmem:[#allocation8 + $0x1a8] sm:$0xff]
        %v741 = vld [vmem:[#allocation8 + $0x1b0] sm:$0xff]
        %v742 = vld [vmem:[#allocation8 + $0x1b8] sm:$0xff]
        %v743 = vld [vmem:[#allocation8 + $0x1c0] sm:$0xff]
        %v744 = vld [vmem:[#allocation8 + $0x1c8] sm:$0xff]
        %v745 = vld [vmem:[#allocation8 + $0x1d0] sm:$0xff]
        %v746 = vld [vmem:[#allocation8 + $0x1d8] sm:$0xff]
        %v747 = vld [vmem:[#allocation8 + $0x1e0] sm:$0xff]
        %v748 = vld [vmem:[#allocation8 + $0x1e8] sm:$0xff]
        %v749 = vld [vmem:[#allocation8 + $0x1f0] sm:$0xff]
        %v750 = vld [vmem:[#allocation8 + $0x1f8] sm:$0xff]
        %v751 = vld [vmem:[#allocation15] sm:$0xff]
        %v752 = vld [vmem:[#allocation17] sm:$0xff]
        %s753 = smul.u32 0, 4
        %s754 = smul.addr %s753, 8
        %s755 = scalar_lea.vmem [#allocation2], %s754
        %v756 = vld [vmem:[%s755] sm:$0xff]
        %v757 = vld [vmem:[%s755 + $0x8] sm:$0xff]
        %v758 = vld [vmem:[%s755 + $0x10] sm:$0xff]
        %v759 = vld [vmem:[%s755 + $0x18] sm:$0xff]
        %760 = vmatpush.msra.mxu0 %v747
        %761 = vmatpush.msra.mxu0 %v743
        %762 = vmatpush.msra.mxu0 %v739
        %763 = vmatpush.msra.mxu0 %v735
        %764 = vmatpush.msra.mxu0 %v731
        %765 = vmatpush.msra.mxu0 %v727
        %766 = vmatpush.msra.mxu0 %v723
        %767 = vmatpush.msra.mxu0 %v719
        %768 = vmatpush.msra.mxu0 %v715
        %769 = vmatpush.msra.mxu0 %v711
        %770 = vmatpush.msra.mxu0 %v707
        %771 = vmatpush.msra.mxu0 %v703
        %772 = vmatpush.msra.mxu0 %v699
        %773 = vmatpush.msra.mxu0 %v695
        %774 = vmatpush.msra.mxu0 %v691
        %775 = vmatpush.msra.mxu0 %v687
        %776 = vmatmul.f32.gmra.mxu0 %v751
        %v777 = vpop.f32.mrf.mxu0
        %v778 = vadd.f32 0.0, %v777
        %779 = vdwg.mxu0
        %780 = vmatpush.msra.mxu0 %v748
        %781 = vmatpush.msra.mxu0 %v744
        %782 = vmatpush.msra.mxu0 %v740
        %783 = vmatpush.msra.mxu0 %v736
        %784 = vmatpush.msra.mxu0 %v732
        %785 = vmatpush.msra.mxu0 %v728
        %786 = vmatpush.msra.mxu0 %v724
        %787 = vmatpush.msra.mxu0 %v720
        %788 = vmatpush.msra.mxu0 %v716
        %789 = vmatpush.msra.mxu0 %v712
        %790 = vmatpush.msra.mxu0 %v708
        %791 = vmatpush.msra.mxu0 %v704
        %792 = vmatpush.msra.mxu0 %v700
        %793 = vmatpush.msra.mxu0 %v696
        %794 = vmatpush.msra.mxu0 %v692
        %795 = vmatpush.msra.mxu0 %v688
        %796 = vmatmul.f32.gmra.mxu0 %v751
        %v797 = vpop.f32.mrf.mxu0
        %v798 = vadd.f32 0.0, %v797
        %799 = vdwg.mxu0
        %800 = vmatpush.msra.mxu0 %v749
        %801 = vmatpush.msra.mxu0 %v745
        %802 = vmatpush.msra.mxu0 %v741
        %803 = vmatpush.msra.mxu0 %v737
        %804 = vmatpush.msra.mxu0 %v733
        %805 = vmatpush.msra.mxu0 %v729
        %806 = vmatpush.msra.mxu0 %v725
        %807 = vmatpush.msra.mxu0 %v721
        %808 = vmatpush.msra.mxu0 %v717
        %809 = vmatpush.msra.mxu0 %v713
        %810 = vmatpush.msra.mxu0 %v709
        %811 = vmatpush.msra.mxu0 %v705
        %812 = vmatpush.msra.mxu0 %v701
        %813 = vmatpush.msra.mxu0 %v697
        %814 = vmatpush.msra.mxu0 %v693
        %815 = vmatpush.msra.mxu0 %v689
        %816 = vmatmul.f32.gmra.mxu0 %v751
        %v817 = vpop.f32.mrf.mxu0
        %v818 = vadd.f32 0.0, %v817
        %819 = vdwg.mxu0
        %820 = vmatpush.msra.mxu0 %v750
        %821 = vmatpush.msra.mxu0 %v746
        %822 = vmatpush.msra.mxu0 %v742
        %823 = vmatpush.msra.mxu0 %v738
        %824 = vmatpush.msra.mxu0 %v734
        %825 = vmatpush.msra.mxu0 %v730
        %826 = vmatpush.msra.mxu0 %v726
        %827 = vmatpush.msra.mxu0 %v722
        %828 = vmatpush.msra.mxu0 %v718
        %829 = vmatpush.msra.mxu0 %v714
        %830 = vmatpush.msra.mxu0 %v710
        %831 = vmatpush.msra.mxu0 %v706
        %832 = vmatpush.msra.mxu0 %v702
        %833 = vmatpush.msra.mxu0 %v698
        %834 = vmatpush.msra.mxu0 %v694
        %835 = vmatpush.msra.mxu0 %v690
        %836 = vmatmul.f32.gmra.mxu0 %v751
        %v837 = vpop.f32.mrf.mxu0
        %v838 = vadd.f32 0.0, %v837
        %839 = vdwg.mxu0
        %v840 = vadd.f32 %v756, %v778
        %v841 = vadd.f32 %v757, %v798
        %v842 = vadd.f32 %v758, %v818
        %v843 = vadd.f32 %v759, %v838
        %v844 = vxor.u32 %v840, 2147483648
        %v845 = vmul.f32 %v844, 1.442695
        %v846 = vpow.pop %v845
        %v847 = vadd.f32 %v846, 1.0
        %v848 = vrcp.pop %v847
        %v849 = vmul.f32 %v847, %v848
        %v850 = vsub.f32 1.0, %v849
        %v851 = vmul.f32 %v848, %v850
        %v852 = vadd.f32 %v848, %v851
        %vm853 = vweird.f32 %v847
        %vm854 = vweird.f32 %v848
        %vm855 = vmor %vm853, %vm854
        %v856 = vsel %vm855, %v848, %v852
        %v857 = vand.u32 2147483647, %v847
        %vm858 = vcmp.eq.f32.partialorder %v857, 8.507059e+37
        %v859 = vand.u32 %v847, 2147483648
        %v860 = vor.u32 1.1754944e-38, %v859
        %v861 = vsel %vm858, %v860, %v856
        %v862 = vmul.f32 1.0, %v861
        %v863 = vxor.u32 %v841, 2147483648
        %v864 = vmul.f32 %v863, 1.442695
        %v865 = vpow.pop %v864
        %v866 = vadd.f32 %v865, 1.0
        %v867 = vrcp.pop %v866
        %v868 = vmul.f32 %v866, %v867
        %v869 = vsub.f32 1.0, %v868
        %v870 = vmul.f32 %v867, %v869
        %v871 = vadd.f32 %v867, %v870
        %vm872 = vweird.f32 %v866
        %vm873 = vweird.f32 %v867
        %vm874 = vmor %vm872, %vm873
        %v875 = vsel %vm874, %v867, %v871
        %v876 = vand.u32 2147483647, %v866
        %vm877 = vcmp.eq.f32.partialorder %v876, 8.507059e+37
        %v878 = vand.u32 %v866, 2147483648
        %v879 = vor.u32 1.1754944e-38, %v878
        %v880 = vsel %vm877, %v879, %v875
        %v881 = vmul.f32 1.0, %v880
        %v882 = vtanh.pop %v842
        %v883 = vxor.u32 %v843, 2147483648
        %v884 = vmul.f32 %v883, 1.442695
        %v885 = vpow.pop %v884
        %v886 = vadd.f32 %v885, 1.0
        %v887 = vrcp.pop %v886
        %v888 = vmul.f32 %v886, %v887
        %v889 = vsub.f32 1.0, %v888
        %v890 = vmul.f32 %v887, %v889
        %v891 = vadd.f32 %v887, %v890
        %vm892 = vweird.f32 %v886
        %vm893 = vweird.f32 %v887
        %vm894 = vmor %vm892, %vm893
        %v895 = vsel %vm894, %v887, %v891
        %v896 = vand.u32 2147483647, %v886
        %vm897 = vcmp.eq.f32.partialorder %v896, 8.507059e+37
        %v898 = vand.u32 %v886, 2147483648
        %v899 = vor.u32 1.1754944e-38, %v898
        %v900 = vsel %vm897, %v899, %v895
        %v901 = vmul.f32 1.0, %v900
        %v902 = vmul.f32 %v881, %v752
        %v903 = vmul.f32 %v862, %v882
        %v904 = vadd.f32 %v902, %v903
        %v905 = vtanh.pop %v904
        %v906 = vmul.f32 %v901, %v905
        %907 = vst [vmem:[%s394] sm:$0xff] %v906
        %s908 = smul.u32 1, 4
        %s909 = smul.addr %s908, 8
        %s910 = scalar_lea.vmem [#allocation2], %s909
        %v911 = vld [vmem:[%s910] sm:$0xff]
        %v912 = vld [vmem:[%s910 + $0x8] sm:$0xff]
        %v913 = vld [vmem:[%s910 + $0x10] sm:$0xff]
        %v914 = vld [vmem:[%s910 + $0x18] sm:$0xff]
        %915 = vmatpush.msra.mxu0 %v747
        %916 = vmatpush.msra.mxu0 %v743
        %917 = vmatpush.msra.mxu0 %v739
        %918 = vmatpush.msra.mxu0 %v735
        %919 = vmatpush.msra.mxu0 %v731
        %920 = vmatpush.msra.mxu0 %v727
        %921 = vmatpush.msra.mxu0 %v723
        %922 = vmatpush.msra.mxu0 %v719
        %923 = vmatpush.msra.mxu0 %v715
        %924 = vmatpush.msra.mxu0 %v711
        %925 = vmatpush.msra.mxu0 %v707
        %926 = vmatpush.msra.mxu0 %v703
        %927 = vmatpush.msra.mxu0 %v699
        %928 = vmatpush.msra.mxu0 %v695
        %929 = vmatpush.msra.mxu0 %v691
        %930 = vmatpush.msra.mxu0 %v687
        %931 = vmatmul.f32.gmra.mxu0 %v906
        %v932 = vpop.f32.mrf.mxu0
        %v933 = vadd.f32 0.0, %v932
        %934 = vdwg.mxu0
        %935 = vmatpush.msra.mxu0 %v748
        %936 = vmatpush.msra.mxu0 %v744
        %937 = vmatpush.msra.mxu0 %v740
        %938 = vmatpush.msra.mxu0 %v736
        %939 = vmatpush.msra.mxu0 %v732
        %940 = vmatpush.msra.mxu0 %v728
        %941 = vmatpush.msra.mxu0 %v724
        %942 = vmatpush.msra.mxu0 %v720
        %943 = vmatpush.msra.mxu0 %v716
        %944 = vmatpush.msra.mxu0 %v712
        %945 = vmatpush.msra.mxu0 %v708
        %946 = vmatpush.msra.mxu0 %v704
        %947 = vmatpush.msra.mxu0 %v700
        %948 = vmatpush.msra.mxu0 %v696
        %949 = vmatpush.msra.mxu0 %v692
        %950 = vmatpush.msra.mxu0 %v688
        %951 = vmatmul.f32.gmra.mxu0 %v906
        %v952 = vpop.f32.mrf.mxu0
        %v953 = vadd.f32 0.0, %v952
        %954 = vdwg.mxu0
        %955 = vmatpush.msra.mxu0 %v749
        %956 = vmatpush.msra.mxu0 %v745
        %957 = vmatpush.msra.mxu0 %v741
        %958 = vmatpush.msra.mxu0 %v737
        %959 = vmatpush.msra.mxu0 %v733
        %960 = vmatpush.msra.mxu0 %v729
        %961 = vmatpush.msra.mxu0 %v725
        %962 = vmatpush.msra.mxu0 %v721
        %963 = vmatpush.msra.mxu0 %v717
        %964 = vmatpush.msra.mxu0 %v713
        %965 = vmatpush.msra.mxu0 %v709
        %966 = vmatpush.msra.mxu0 %v705
        %967 = vmatpush.msra.mxu0 %v701
        %968 = vmatpush.msra.mxu0 %v697
        %969 = vmatpush.msra.mxu0 %v693
        %970 = vmatpush.msra.mxu0 %v689
        %971 = vmatmul.f32.gmra.mxu0 %v906
        %v972 = vpop.f32.mrf.mxu0
        %v973 = vadd.f32 0.0, %v972
        %974 = vdwg.mxu0
        %975 = vmatpush.msra.mxu0 %v750
        %976 = vmatpush.msra.mxu0 %v746
        %977 = vmatpush.msra.mxu0 %v742
        %978 = vmatpush.msra.mxu0 %v738
        %979 = vmatpush.msra.mxu0 %v734
        %980 = vmatpush.msra.mxu0 %v730
        %981 = vmatpush.msra.mxu0 %v726
        %982 = vmatpush.msra.mxu0 %v722
        %983 = vmatpush.msra.mxu0 %v718
        %984 = vmatpush.msra.mxu0 %v714
        %985 = vmatpush.msra.mxu0 %v710
        %986 = vmatpush.msra.mxu0 %v706
        %987 = vmatpush.msra.mxu0 %v702
        %988 = vmatpush.msra.mxu0 %v698
        %989 = vmatpush.msra.mxu0 %v694
        %990 = vmatpush.msra.mxu0 %v690
        %991 = vmatmul.f32.gmra.mxu0 %v906
        %v992 = vpop.f32.mrf.mxu0
        %v993 = vadd.f32 0.0, %v992
        %994 = vdwg.mxu0
        %v995 = vadd.f32 %v911, %v933
        %v996 = vadd.f32 %v912, %v953
        %v997 = vadd.f32 %v913, %v973
        %v998 = vadd.f32 %v914, %v993
        %v999 = vxor.u32 %v995, 2147483648
        %v1000 = vmul.f32 %v999, 1.442695
        %v1001 = vpow.pop %v1000
        %v1002 = vadd.f32 %v1001, 1.0
        %v1003 = vrcp.pop %v1002
        %v1004 = vmul.f32 %v1002, %v1003
        %v1005 = vsub.f32 1.0, %v1004
        %v1006 = vmul.f32 %v1003, %v1005
        %v1007 = vadd.f32 %v1003, %v1006
        %vm1008 = vweird.f32 %v1002
        %vm1009 = vweird.f32 %v1003
        %vm1010 = vmor %vm1008, %vm1009
        %v1011 = vsel %vm1010, %v1003, %v1007
        %v1012 = vand.u32 2147483647, %v1002
        %vm1013 = vcmp.eq.f32.partialorder %v1012, 8.507059e+37
        %v1014 = vand.u32 %v1002, 2147483648
        %v1015 = vor.u32 1.1754944e-38, %v1014
        %v1016 = vsel %vm1013, %v1015, %v1011
        %v1017 = vmul.f32 1.0, %v1016
        %v1018 = vxor.u32 %v996, 2147483648
        %v1019 = vmul.f32 %v1018, 1.442695
        %v1020 = vpow.pop %v1019
        %v1021 = vadd.f32 %v1020, 1.0
        %v1022 = vrcp.pop %v1021
        %v1023 = vmul.f32 %v1021, %v1022
        %v1024 = vsub.f32 1.0, %v1023
        %v1025 = vmul.f32 %v1022, %v1024
        %v1026 = vadd.f32 %v1022, %v1025
        %vm1027 = vweird.f32 %v1021
        %vm1028 = vweird.f32 %v1022
        %vm1029 = vmor %vm1027, %vm1028
        %v1030 = vsel %vm1029, %v1022, %v1026
        %v1031 = vand.u32 2147483647, %v1021
        %vm1032 = vcmp.eq.f32.partialorder %v1031, 8.507059e+37
        %v1033 = vand.u32 %v1021, 2147483648
        %v1034 = vor.u32 1.1754944e-38, %v1033
        %v1035 = vsel %vm1032, %v1034, %v1030
        %v1036 = vmul.f32 1.0, %v1035
        %v1037 = vtanh.pop %v997
        %v1038 = vxor.u32 %v998, 2147483648
        %v1039 = vmul.f32 %v1038, 1.442695
        %v1040 = vpow.pop %v1039
        %v1041 = vadd.f32 %v1040, 1.0
        %v1042 = vrcp.pop %v1041
        %v1043 = vmul.f32 %v1041, %v1042
        %v1044 = vsub.f32 1.0, %v1043
        %v1045 = vmul.f32 %v1042, %v1044
        %v1046 = vadd.f32 %v1042, %v1045
        %vm1047 = vweird.f32 %v1041
        %vm1048 = vweird.f32 %v1042
        %vm1049 = vmor %vm1047, %vm1048
        %v1050 = vsel %vm1049, %v1042, %v1046
        %v1051 = vand.u32 2147483647, %v1041
        %vm1052 = vcmp.eq.f32.partialorder %v1051, 8.507059e+37
        %v1053 = vand.u32 %v1041, 2147483648
        %v1054 = vor.u32 1.1754944e-38, %v1053
        %v1055 = vsel %vm1052, %v1054, %v1050
        %v1056 = vmul.f32 1.0, %v1055
        %v1057 = vmul.f32 %v1036, %v904
        %v1058 = vmul.f32 %v1017, %v1037
        %v1059 = vadd.f32 %v1057, %v1058
        %v1060 = vtanh.pop %v1059
        %v1061 = vmul.f32 %v1056, %v1060
        %s1062 = scalar_lea.vmem %s394, 8 [#allocation14]
        %1063 = vst [vmem:[%s1062] sm:$0xff] %v1061
        %s1064 = smul.u32 2, 4
        %s1065 = smul.addr %s1064, 8
        %s1066 = scalar_lea.vmem [#allocation2], %s1065
        %v1067 = vld [vmem:[%s1066] sm:$0xff]
        %v1068 = vld [vmem:[%s1066 + $0x8] sm:$0xff]
        %v1069 = vld [vmem:[%s1066 + $0x10] sm:$0xff]
        %v1070 = vld [vmem:[%s1066 + $0x18] sm:$0xff]
        %1071 = vmatpush.msra.mxu0 %v747
        %1072 = vmatpush.msra.mxu0 %v743
        %1073 = vmatpush.msra.mxu0 %v739
        %1074 = vmatpush.msra.mxu0 %v735
        %1075 = vmatpush.msra.mxu0 %v731
        %1076 = vmatpush.msra.mxu0 %v727
        %1077 = vmatpush.msra.mxu0 %v723
        %1078 = vmatpush.msra.mxu0 %v719
        %1079 = vmatpush.msra.mxu0 %v715
        %1080 = vmatpush.msra.mxu0 %v711
        %1081 = vmatpush.msra.mxu0 %v707
        %1082 = vmatpush.msra.mxu0 %v703
        %1083 = vmatpush.msra.mxu0 %v699
        %1084 = vmatpush.msra.mxu0 %v695
        %1085 = vmatpush.msra.mxu0 %v691
        %1086 = vmatpush.msra.mxu0 %v687
        %1087 = vmatmul.f32.gmra.mxu0 %v1061
        %v1088 = vpop.f32.mrf.mxu0
        %v1089 = vadd.f32 0.0, %v1088
        %1090 = vdwg.mxu0
        %1091 = vmatpush.msra.mxu0 %v748
        %1092 = vmatpush.msra.mxu0 %v744
        %1093 = vmatpush.msra.mxu0 %v740
        %1094 = vmatpush.msra.mxu0 %v736
        %1095 = vmatpush.msra.mxu0 %v732
        %1096 = vmatpush.msra.mxu0 %v728
        %1097 = vmatpush.msra.mxu0 %v724
        %1098 = vmatpush.msra.mxu0 %v720
        %1099 = vmatpush.msra.mxu0 %v716
        %1100 = vmatpush.msra.mxu0 %v712
        %1101 = vmatpush.msra.mxu0 %v708
        %1102 = vmatpush.msra.mxu0 %v704
        %1103 = vmatpush.msra.mxu0 %v700
        %1104 = vmatpush.msra.mxu0 %v696
        %1105 = vmatpush.msra.mxu0 %v692
        %1106 = vmatpush.msra.mxu0 %v688
        %1107 = vmatmul.f32.gmra.mxu0 %v1061
        %v1108 = vpop.f32.mrf.mxu0
        %v1109 = vadd.f32 0.0, %v1108
        %1110 = vdwg.mxu0
        %1111 = vmatpush.msra.mxu0 %v749
        %1112 = vmatpush.msra.mxu0 %v745
        %1113 = vmatpush.msra.mxu0 %v741
        %1114 = vmatpush.msra.mxu0 %v737
        %1115 = vmatpush.msra.mxu0 %v733
        %1116 = vmatpush.msra.mxu0 %v729
        %1117 = vmatpush.msra.mxu0 %v725
        %1118 = vmatpush.msra.mxu0 %v721
        %1119 = vmatpush.msra.mxu0 %v717
        %1120 = vmatpush.msra.mxu0 %v713
        %1121 = vmatpush.msra.mxu0 %v709
        %1122 = vmatpush.msra.mxu0 %v705
        %1123 = vmatpush.msra.mxu0 %v701
        %1124 = vmatpush.msra.mxu0 %v697
        %1125 = vmatpush.msra.mxu0 %v693
        %1126 = vmatpush.msra.mxu0 %v689
        %1127 = vmatmul.f32.gmra.mxu0 %v1061
        %v1128 = vpop.f32.mrf.mxu0
        %v1129 = vadd.f32 0.0, %v1128
        %1130 = vdwg.mxu0
        %1131 = vmatpush.msra.mxu0 %v750
        %1132 = vmatpush.msra.mxu0 %v746
        %1133 = vmatpush.msra.mxu0 %v742
        %1134 = vmatpush.msra.mxu0 %v738
        %1135 = vmatpush.msra.mxu0 %v734
        %1136 = vmatpush.msra.mxu0 %v730
        %1137 = vmatpush.msra.mxu0 %v726
        %1138 = vmatpush.msra.mxu0 %v722
        %1139 = vmatpush.msra.mxu0 %v718
        %1140 = vmatpush.msra.mxu0 %v714
        %1141 = vmatpush.msra.mxu0 %v710
        %1142 = vmatpush.msra.mxu0 %v706
        %1143 = vmatpush.msra.mxu0 %v702
        %1144 = vmatpush.msra.mxu0 %v698
        %1145 = vmatpush.msra.mxu0 %v694
        %1146 = vmatpush.msra.mxu0 %v690
        %1147 = vmatmul.f32.gmra.mxu0 %v1061
        %v1148 = vpop.f32.mrf.mxu0
        %v1149 = vadd.f32 0.0, %v1148
        %1150 = vdwg.mxu0
        %v1151 = vadd.f32 %v1067, %v1089
        %v1152 = vadd.f32 %v1068, %v1109
        %v1153 = vadd.f32 %v1069, %v1129
        %v1154 = vadd.f32 %v1070, %v1149
        %v1155 = vxor.u32 %v1151, 2147483648
        %v1156 = vmul.f32 %v1155, 1.442695
        %v1157 = vpow.pop %v1156
        %v1158 = vadd.f32 %v1157, 1.0
        %v1159 = vrcp.pop %v1158
        %v1160 = vmul.f32 %v1158, %v1159
        %v1161 = vsub.f32 1.0, %v1160
        %v1162 = vmul.f32 %v1159, %v1161
        %v1163 = vadd.f32 %v1159, %v1162
        %vm1164 = vweird.f32 %v1158
        %vm1165 = vweird.f32 %v1159
        %vm1166 = vmor %vm1164, %vm1165
        %v1167 = vsel %vm1166, %v1159, %v1163
        %v1168 = vand.u32 2147483647, %v1158
        %vm1169 = vcmp.eq.f32.partialorder %v1168, 8.507059e+37
        %v1170 = vand.u32 %v1158, 2147483648
        %v1171 = vor.u32 1.1754944e-38, %v1170
        %v1172 = vsel %vm1169, %v1171, %v1167
        %v1173 = vmul.f32 1.0, %v1172
        %v1174 = vxor.u32 %v1152, 2147483648
        %v1175 = vmul.f32 %v1174, 1.442695
        %v1176 = vpow.pop %v1175
        %v1177 = vadd.f32 %v1176, 1.0
        %v1178 = vrcp.pop %v1177
        %v1179 = vmul.f32 %v1177, %v1178
        %v1180 = vsub.f32 1.0, %v1179
        %v1181 = vmul.f32 %v1178, %v1180
        %v1182 = vadd.f32 %v1178, %v1181
        %vm1183 = vweird.f32 %v1177
        %vm1184 = vweird.f32 %v1178
        %vm1185 = vmor %vm1183, %vm1184
        %v1186 = vsel %vm1185, %v1178, %v1182
        %v1187 = vand.u32 2147483647, %v1177
        %vm1188 = vcmp.eq.f32.partialorder %v1187, 8.507059e+37
        %v1189 = vand.u32 %v1177, 2147483648
        %v1190 = vor.u32 1.1754944e-38, %v1189
        %v1191 = vsel %vm1188, %v1190, %v1186
        %v1192 = vmul.f32 1.0, %v1191
        %v1193 = vtanh.pop %v1153
        %v1194 = vxor.u32 %v1154, 2147483648
        %v1195 = vmul.f32 %v1194, 1.442695
        %v1196 = vpow.pop %v1195
        %v1197 = vadd.f32 %v1196, 1.0
        %v1198 = vrcp.pop %v1197
        %v1199 = vmul.f32 %v1197, %v1198
        %v1200 = vsub.f32 1.0, %v1199
        %v1201 = vmul.f32 %v1198, %v1200
        %v1202 = vadd.f32 %v1198, %v1201
        %vm1203 = vweird.f32 %v1197
        %vm1204 = vweird.f32 %v1198
        %vm1205 = vmor %vm1203, %vm1204
        %v1206 = vsel %vm1205, %v1198, %v1202
        %v1207 = vand.u32 2147483647, %v1197
        %vm1208 = vcmp.eq.f32.partialorder %v1207, 8.507059e+37
        %v1209 = vand.u32 %v1197, 2147483648
        %v1210 = vor.u32 1.1754944e-38, %v1209
        %v1211 = vsel %vm1208, %v1210, %v1206
        %v1212 = vmul.f32 1.0, %v1211
        %v1213 = vmul.f32 %v1192, %v1059
        %v1214 = vmul.f32 %v1173, %v1193
        %v1215 = vadd.f32 %v1213, %v1214
        %v1216 = vtanh.pop %v1215
        %v1217 = vmul.f32 %v1212, %v1216
        %s1218 = scalar_lea.vmem %s394, 16 [#allocation14]
        %1219 = vst [vmem:[%s1218] sm:$0xff] %v1217
        %s1220 = smul.u32 3, 4
        %s1221 = smul.addr %s1220, 8
        %s1222 = scalar_lea.vmem [#allocation2], %s1221
        %v1223 = vld [vmem:[%s1222] sm:$0xff]
        %v1224 = vld [vmem:[%s1222 + $0x8] sm:$0xff]
        %v1225 = vld [vmem:[%s1222 + $0x10] sm:$0xff]
        %v1226 = vld [vmem:[%s1222 + $0x18] sm:$0xff]
        %1227 = vmatpush.msra.mxu0 %v747
        %1228 = vmatpush.msra.mxu0 %v743
        %1229 = vmatpush.msra.mxu0 %v739
        %1230 = vmatpush.msra.mxu0 %v735
        %1231 = vmatpush.msra.mxu0 %v731
        %1232 = vmatpush.msra.mxu0 %v727
        %1233 = vmatpush.msra.mxu0 %v723
        %1234 = vmatpush.msra.mxu0 %v719
        %1235 = vmatpush.msra.mxu0 %v715
        %1236 = vmatpush.msra.mxu0 %v711
        %1237 = vmatpush.msra.mxu0 %v707
        %1238 = vmatpush.msra.mxu0 %v703
        %1239 = vmatpush.msra.mxu0 %v699
        %1240 = vmatpush.msra.mxu0 %v695
        %1241 = vmatpush.msra.mxu0 %v691
        %1242 = vmatpush.msra.mxu0 %v687
        %1243 = vmatmul.f32.gmra.mxu0 %v1217
        %v1244 = vpop.f32.mrf.mxu0
        %v1245 = vadd.f32 0.0, %v1244
        %1246 = vdwg.mxu0
        %1247 = vmatpush.msra.mxu0 %v748
        %1248 = vmatpush.msra.mxu0 %v744
        %1249 = vmatpush.msra.mxu0 %v740
        %1250 = vmatpush.msra.mxu0 %v736
        %1251 = vmatpush.msra.mxu0 %v732
        %1252 = vmatpush.msra.mxu0 %v728
        %1253 = vmatpush.msra.mxu0 %v724
        %1254 = vmatpush.msra.mxu0 %v720
        %1255 = vmatpush.msra.mxu0 %v716
        %1256 = vmatpush.msra.mxu0 %v712
        %1257 = vmatpush.msra.mxu0 %v708
        %1258 = vmatpush.msra.mxu0 %v704
        %1259 = vmatpush.msra.mxu0 %v700
        %1260 = vmatpush.msra.mxu0 %v696
        %1261 = vmatpush.msra.mxu0 %v692
        %1262 = vmatpush.msra.mxu0 %v688
        %1263 = vmatmul.f32.gmra.mxu0 %v1217
        %v1264 = vpop.f32.mrf.mxu0
        %v1265 = vadd.f32 0.0, %v1264
        %1266 = vdwg.mxu0
        %1267 = vmatpush.msra.mxu0 %v749
        %1268 = vmatpush.msra.mxu0 %v745
        %1269 = vmatpush.msra.mxu0 %v741
        %1270 = vmatpush.msra.mxu0 %v737
        %1271 = vmatpush.msra.mxu0 %v733
        %1272 = vmatpush.msra.mxu0 %v729
        %1273 = vmatpush.msra.mxu0 %v725
        %1274 = vmatpush.msra.mxu0 %v721
        %1275 = vmatpush.msra.mxu0 %v717
        %1276 = vmatpush.msra.mxu0 %v713
        %1277 = vmatpush.msra.mxu0 %v709
        %1278 = vmatpush.msra.mxu0 %v705
        %1279 = vmatpush.msra.mxu0 %v701
        %1280 = vmatpush.msra.mxu0 %v697
        %1281 = vmatpush.msra.mxu0 %v693
        %1282 = vmatpush.msra.mxu0 %v689
        %1283 = vmatmul.f32.gmra.mxu0 %v1217
        %v1284 = vpop.f32.mrf.mxu0
        %v1285 = vadd.f32 0.0, %v1284
        %1286 = vdwg.mxu0
        %1287 = vmatpush.msra.mxu0 %v750
        %1288 = vmatpush.msra.mxu0 %v746
        %1289 = vmatpush.msra.mxu0 %v742
        %1290 = vmatpush.msra.mxu0 %v738
        %1291 = vmatpush.msra.mxu0 %v734
        %1292 = vmatpush.msra.mxu0 %v730
        %1293 = vmatpush.msra.mxu0 %v726
        %1294 = vmatpush.msra.mxu0 %v722
        %1295 = vmatpush.msra.mxu0 %v718
        %1296 = vmatpush.msra.mxu0 %v714
        %1297 = vmatpush.msra.mxu0 %v710
        %1298 = vmatpush.msra.mxu0 %v706
        %1299 = vmatpush.msra.mxu0 %v702
        %1300 = vmatpush.msra.mxu0 %v698
        %1301 = vmatpush.msra.mxu0 %v694
        %1302 = vmatpush.msra.mxu0 %v690
        %1303 = vmatmul.f32.gmra.mxu0 %v1217
        %v1304 = vpop.f32.mrf.mxu0
        %v1305 = vadd.f32 0.0, %v1304
        %1306 = vdwg.mxu0
        %v1307 = vadd.f32 %v1223, %v1245
        %v1308 = vadd.f32 %v1224, %v1265
        %v1309 = vadd.f32 %v1225, %v1285
        %v1310 = vadd.f32 %v1226, %v1305
        %v1311 = vxor.u32 %v1307, 2147483648
        %v1312 = vmul.f32 %v1311, 1.442695
        %v1313 = vpow.pop %v1312
        %v1314 = vadd.f32 %v1313, 1.0
        %v1315 = vrcp.pop %v1314
        %v1316 = vmul.f32 %v1314, %v1315
        %v1317 = vsub.f32 1.0, %v1316
        %v1318 = vmul.f32 %v1315, %v1317
        %v1319 = vadd.f32 %v1315, %v1318
        %vm1320 = vweird.f32 %v1314
        %vm1321 = vweird.f32 %v1315
        %vm1322 = vmor %vm1320, %vm1321
        %v1323 = vsel %vm1322, %v1315, %v1319
        %v1324 = vand.u32 2147483647, %v1314
        %vm1325 = vcmp.eq.f32.partialorder %v1324, 8.507059e+37
        %v1326 = vand.u32 %v1314, 2147483648
        %v1327 = vor.u32 1.1754944e-38, %v1326
        %v1328 = vsel %vm1325, %v1327, %v1323
        %v1329 = vmul.f32 1.0, %v1328
        %v1330 = vxor.u32 %v1308, 2147483648
        %v1331 = vmul.f32 %v1330, 1.442695
        %v1332 = vpow.pop %v1331
        %v1333 = vadd.f32 %v1332, 1.0
        %v1334 = vrcp.pop %v1333
        %v1335 = vmul.f32 %v1333, %v1334
        %v1336 = vsub.f32 1.0, %v1335
        %v1337 = vmul.f32 %v1334, %v1336
        %v1338 = vadd.f32 %v1334, %v1337
        %vm1339 = vweird.f32 %v1333
        %vm1340 = vweird.f32 %v1334
        %vm1341 = vmor %vm1339, %vm1340
        %v1342 = vsel %vm1341, %v1334, %v1338
        %v1343 = vand.u32 2147483647, %v1333
        %vm1344 = vcmp.eq.f32.partialorder %v1343, 8.507059e+37
        %v1345 = vand.u32 %v1333, 2147483648
        %v1346 = vor.u32 1.1754944e-38, %v1345
        %v1347 = vsel %vm1344, %v1346, %v1342
        %v1348 = vmul.f32 1.0, %v1347
        %v1349 = vtanh.pop %v1309
        %v1350 = vxor.u32 %v1310, 2147483648
        %v1351 = vmul.f32 %v1350, 1.442695
        %v1352 = vpow.pop %v1351
        %v1353 = vadd.f32 %v1352, 1.0
        %v1354 = vrcp.pop %v1353
        %v1355 = vmul.f32 %v1353, %v1354
        %v1356 = vsub.f32 1.0, %v1355
        %v1357 = vmul.f32 %v1354, %v1356
        %v1358 = vadd.f32 %v1354, %v1357
        %vm1359 = vweird.f32 %v1353
        %vm1360 = vweird.f32 %v1354
        %vm1361 = vmor %vm1359, %vm1360
        %v1362 = vsel %vm1361, %v1354, %v1358
        %v1363 = vand.u32 2147483647, %v1353
        %vm1364 = vcmp.eq.f32.partialorder %v1363, 8.507059e+37
        %v1365 = vand.u32 %v1353, 2147483648
        %v1366 = vor.u32 1.1754944e-38, %v1365
        %v1367 = vsel %vm1364, %v1366, %v1362
        %v1368 = vmul.f32 1.0, %v1367
        %v1369 = vmul.f32 %v1348, %v1215
        %v1370 = vmul.f32 %v1329, %v1349
        %v1371 = vadd.f32 %v1369, %v1370
        %v1372 = vtanh.pop %v1371
        %v1373 = vmul.f32 %v1368, %v1372
        %s1374 = scalar_lea.vmem %s394, 24 [#allocation14]
        %1375 = vst [vmem:[%s1374] sm:$0xff] %v1373
        %s1376 = smul.u32 4, 4
        %s1377 = smul.addr %s1376, 8
        %s1378 = scalar_lea.vmem [#allocation2], %s1377
        %v1379 = vld [vmem:[%s1378] sm:$0xff]
        %v1380 = vld [vmem:[%s1378 + $0x8] sm:$0xff]
        %v1381 = vld [vmem:[%s1378 + $0x10] sm:$0xff]
        %v1382 = vld [vmem:[%s1378 + $0x18] sm:$0xff]
        %1383 = vmatpush.msra.mxu0 %v747
        %1384 = vmatpush.msra.mxu0 %v743
        %1385 = vmatpush.msra.mxu0 %v739
        %1386 = vmatpush.msra.mxu0 %v735
        %1387 = vmatpush.msra.mxu0 %v731
        %1388 = vmatpush.msra.mxu0 %v727
        %1389 = vmatpush.msra.mxu0 %v723
        %1390 = vmatpush.msra.mxu0 %v719
        %1391 = vmatpush.msra.mxu0 %v715
        %1392 = vmatpush.msra.mxu0 %v711
        %1393 = vmatpush.msra.mxu0 %v707
        %1394 = vmatpush.msra.mxu0 %v703
        %1395 = vmatpush.msra.mxu0 %v699
        %1396 = vmatpush.msra.mxu0 %v695
        %1397 = vmatpush.msra.mxu0 %v691
        %1398 = vmatpush.msra.mxu0 %v687
        %1399 = vmatmul.f32.gmra.mxu0 %v1373
        %v1400 = vpop.f32.mrf.mxu0
        %v1401 = vadd.f32 0.0, %v1400
        %1402 = vdwg.mxu0
        %1403 = vmatpush.msra.mxu0 %v748
        %1404 = vmatpush.msra.mxu0 %v744
        %1405 = vmatpush.msra.mxu0 %v740
        %1406 = vmatpush.msra.mxu0 %v736
        %1407 = vmatpush.msra.mxu0 %v732
        %1408 = vmatpush.msra.mxu0 %v728
        %1409 = vmatpush.msra.mxu0 %v724
        %1410 = vmatpush.msra.mxu0 %v720
        %1411 = vmatpush.msra.mxu0 %v716
        %1412 = vmatpush.msra.mxu0 %v712
        %1413 = vmatpush.msra.mxu0 %v708
        %1414 = vmatpush.msra.mxu0 %v704
        %1415 = vmatpush.msra.mxu0 %v700
        %1416 = vmatpush.msra.mxu0 %v696
        %1417 = vmatpush.msra.mxu0 %v692
        %1418 = vmatpush.msra.mxu0 %v688
        %1419 = vmatmul.f32.gmra.mxu0 %v1373
        %v1420 = vpop.f32.mrf.mxu0
        %v1421 = vadd.f32 0.0, %v1420
        %1422 = vdwg.mxu0
        %1423 = vmatpush.msra.mxu0 %v749
        %1424 = vmatpush.msra.mxu0 %v745
        %1425 = vmatpush.msra.mxu0 %v741
        %1426 = vmatpush.msra.mxu0 %v737
        %1427 = vmatpush.msra.mxu0 %v733
        %1428 = vmatpush.msra.mxu0 %v729
        %1429 = vmatpush.msra.mxu0 %v725
        %1430 = vmatpush.msra.mxu0 %v721
        %1431 = vmatpush.msra.mxu0 %v717
        %1432 = vmatpush.msra.mxu0 %v713
        %1433 = vmatpush.msra.mxu0 %v709
        %1434 = vmatpush.msra.mxu0 %v705
        %1435 = vmatpush.msra.mxu0 %v701
        %1436 = vmatpush.msra.mxu0 %v697
        %1437 = vmatpush.msra.mxu0 %v693
        %1438 = vmatpush.msra.mxu0 %v689
        %1439 = vmatmul.f32.gmra.mxu0 %v1373
        %v1440 = vpop.f32.mrf.mxu0
        %v1441 = vadd.f32 0.0, %v1440
        %1442 = vdwg.mxu0
        %1443 = vmatpush.msra.mxu0 %v750
        %1444 = vmatpush.msra.mxu0 %v746
        %1445 = vmatpush.msra.mxu0 %v742
        %1446 = vmatpush.msra.mxu0 %v738
        %1447 = vmatpush.msra.mxu0 %v734
        %1448 = vmatpush.msra.mxu0 %v730
        %1449 = vmatpush.msra.mxu0 %v726
        %1450 = vmatpush.msra.mxu0 %v722
        %1451 = vmatpush.msra.mxu0 %v718
        %1452 = vmatpush.msra.mxu0 %v714
        %1453 = vmatpush.msra.mxu0 %v710
        %1454 = vmatpush.msra.mxu0 %v706
        %1455 = vmatpush.msra.mxu0 %v702
        %1456 = vmatpush.msra.mxu0 %v698
        %1457 = vmatpush.msra.mxu0 %v694
        %1458 = vmatpush.msra.mxu0 %v690
        %1459 = vmatmul.f32.gmra.mxu0 %v1373
        %v1460 = vpop.f32.mrf.mxu0
        %v1461 = vadd.f32 0.0, %v1460
        %1462 = vdwg.mxu0
        %v1463 = vadd.f32 %v1379, %v1401
        %v1464 = vadd.f32 %v1380, %v1421
        %v1465 = vadd.f32 %v1381, %v1441
        %v1466 = vadd.f32 %v1382, %v1461
        %v1467 = vxor.u32 %v1463, 2147483648
        %v1468 = vmul.f32 %v1467, 1.442695
        %v1469 = vpow.pop %v1468
        %v1470 = vadd.f32 %v1469, 1.0
        %v1471 = vrcp.pop %v1470
        %v1472 = vmul.f32 %v1470, %v1471
        %v1473 = vsub.f32 1.0, %v1472
        %v1474 = vmul.f32 %v1471, %v1473
        %v1475 = vadd.f32 %v1471, %v1474
        %vm1476 = vweird.f32 %v1470
        %vm1477 = vweird.f32 %v1471
        %vm1478 = vmor %vm1476, %vm1477
        %v1479 = vsel %vm1478, %v1471, %v1475
        %v1480 = vand.u32 2147483647, %v1470
        %vm1481 = vcmp.eq.f32.partialorder %v1480, 8.507059e+37
        %v1482 = vand.u32 %v1470, 2147483648
        %v1483 = vor.u32 1.1754944e-38, %v1482
        %v1484 = vsel %vm1481, %v1483, %v1479
        %v1485 = vmul.f32 1.0, %v1484
        %v1486 = vxor.u32 %v1464, 2147483648
        %v1487 = vmul.f32 %v1486, 1.442695
        %v1488 = vpow.pop %v1487
        %v1489 = vadd.f32 %v1488, 1.0
        %v1490 = vrcp.pop %v1489
        %v1491 = vmul.f32 %v1489, %v1490
        %v1492 = vsub.f32 1.0, %v1491
        %v1493 = vmul.f32 %v1490, %v1492
        %v1494 = vadd.f32 %v1490, %v1493
        %vm1495 = vweird.f32 %v1489
        %vm1496 = vweird.f32 %v1490
        %vm1497 = vmor %vm1495, %vm1496
        %v1498 = vsel %vm1497, %v1490, %v1494
        %v1499 = vand.u32 2147483647, %v1489
        %vm1500 = vcmp.eq.f32.partialorder %v1499, 8.507059e+37
        %v1501 = vand.u32 %v1489, 2147483648
        %v1502 = vor.u32 1.1754944e-38, %v1501
        %v1503 = vsel %vm1500, %v1502, %v1498
        %v1504 = vmul.f32 1.0, %v1503
        %v1505 = vtanh.pop %v1465
        %v1506 = vxor.u32 %v1466, 2147483648
        %v1507 = vmul.f32 %v1506, 1.442695
        %v1508 = vpow.pop %v1507
        %v1509 = vadd.f32 %v1508, 1.0
        %v1510 = vrcp.pop %v1509
        %v1511 = vmul.f32 %v1509, %v1510
        %v1512 = vsub.f32 1.0, %v1511
        %v1513 = vmul.f32 %v1510, %v1512
        %v1514 = vadd.f32 %v1510, %v1513
        %vm1515 = vweird.f32 %v1509
        %vm1516 = vweird.f32 %v1510
        %vm1517 = vmor %vm1515, %vm1516
        %v1518 = vsel %vm1517, %v1510, %v1514
        %v1519 = vand.u32 2147483647, %v1509
        %vm1520 = vcmp.eq.f32.partialorder %v1519, 8.507059e+37
        %v1521 = vand.u32 %v1509, 2147483648
        %v1522 = vor.u32 1.1754944e-38, %v1521
        %v1523 = vsel %vm1520, %v1522, %v1518
        %v1524 = vmul.f32 1.0, %v1523
        %v1525 = vmul.f32 %v1504, %v1371
        %v1526 = vmul.f32 %v1485, %v1505
        %v1527 = vadd.f32 %v1525, %v1526
        %v1528 = vtanh.pop %v1527
        %v1529 = vmul.f32 %v1524, %v1528
        %s1530 = scalar_lea.vmem %s394, 32 [#allocation14]
        %1531 = vst [vmem:[%s1530] sm:$0xff] %v1529
        %s1532 = smul.u32 5, 4
        %s1533 = smul.addr %s1532, 8
        %s1534 = scalar_lea.vmem [#allocation2], %s1533
        %v1535 = vld [vmem:[%s1534] sm:$0xff]
        %v1536 = vld [vmem:[%s1534 + $0x8] sm:$0xff]
        %v1537 = vld [vmem:[%s1534 + $0x10] sm:$0xff]
        %v1538 = vld [vmem:[%s1534 + $0x18] sm:$0xff]
        %1539 = vmatpush.msra.mxu0 %v747
        %1540 = vmatpush.msra.mxu0 %v743
        %1541 = vmatpush.msra.mxu0 %v739
        %1542 = vmatpush.msra.mxu0 %v735
        %1543 = vmatpush.msra.mxu0 %v731
        %1544 = vmatpush.msra.mxu0 %v727
        %1545 = vmatpush.msra.mxu0 %v723
        %1546 = vmatpush.msra.mxu0 %v719
        %1547 = vmatpush.msra.mxu0 %v715
        %1548 = vmatpush.msra.mxu0 %v711
        %1549 = vmatpush.msra.mxu0 %v707
        %1550 = vmatpush.msra.mxu0 %v703
        %1551 = vmatpush.msra.mxu0 %v699
        %1552 = vmatpush.msra.mxu0 %v695
        %1553 = vmatpush.msra.mxu0 %v691
        %1554 = vmatpush.msra.mxu0 %v687
        %1555 = vmatmul.f32.gmra.mxu0 %v1529
        %v1556 = vpop.f32.mrf.mxu0
        %v1557 = vadd.f32 0.0, %v1556
        %1558 = vdwg.mxu0
        %1559 = vmatpush.msra.mxu0 %v748
        %1560 = vmatpush.msra.mxu0 %v744
        %1561 = vmatpush.msra.mxu0 %v740
        %1562 = vmatpush.msra.mxu0 %v736
        %1563 = vmatpush.msra.mxu0 %v732
        %1564 = vmatpush.msra.mxu0 %v728
        %1565 = vmatpush.msra.mxu0 %v724
        %1566 = vmatpush.msra.mxu0 %v720
        %1567 = vmatpush.msra.mxu0 %v716
        %1568 = vmatpush.msra.mxu0 %v712
        %1569 = vmatpush.msra.mxu0 %v708
        %1570 = vmatpush.msra.mxu0 %v704
        %1571 = vmatpush.msra.mxu0 %v700
        %1572 = vmatpush.msra.mxu0 %v696
        %1573 = vmatpush.msra.mxu0 %v692
        %1574 = vmatpush.msra.mxu0 %v688
        %1575 = vmatmul.f32.gmra.mxu0 %v1529
        %v1576 = vpop.f32.mrf.mxu0
        %v1577 = vadd.f32 0.0, %v1576
        %1578 = vdwg.mxu0
        %1579 = vmatpush.msra.mxu0 %v749
        %1580 = vmatpush.msra.mxu0 %v745
        %1581 = vmatpush.msra.mxu0 %v741
        %1582 = vmatpush.msra.mxu0 %v737
        %1583 = vmatpush.msra.mxu0 %v733
        %1584 = vmatpush.msra.mxu0 %v729
        %1585 = vmatpush.msra.mxu0 %v725
        %1586 = vmatpush.msra.mxu0 %v721
        %1587 = vmatpush.msra.mxu0 %v717
        %1588 = vmatpush.msra.mxu0 %v713
        %1589 = vmatpush.msra.mxu0 %v709
        %1590 = vmatpush.msra.mxu0 %v705
        %1591 = vmatpush.msra.mxu0 %v701
        %1592 = vmatpush.msra.mxu0 %v697
        %1593 = vmatpush.msra.mxu0 %v693
        %1594 = vmatpush.msra.mxu0 %v689
        %1595 = vmatmul.f32.gmra.mxu0 %v1529
        %v1596 = vpop.f32.mrf.mxu0
        %v1597 = vadd.f32 0.0, %v1596
        %1598 = vdwg.mxu0
        %1599 = vmatpush.msra.mxu0 %v750
        %1600 = vmatpush.msra.mxu0 %v746
        %1601 = vmatpush.msra.mxu0 %v742
        %1602 = vmatpush.msra.mxu0 %v738
        %1603 = vmatpush.msra.mxu0 %v734
        %1604 = vmatpush.msra.mxu0 %v730
        %1605 = vmatpush.msra.mxu0 %v726
        %1606 = vmatpush.msra.mxu0 %v722
        %1607 = vmatpush.msra.mxu0 %v718
        %1608 = vmatpush.msra.mxu0 %v714
        %1609 = vmatpush.msra.mxu0 %v710
        %1610 = vmatpush.msra.mxu0 %v706
        %1611 = vmatpush.msra.mxu0 %v702
        %1612 = vmatpush.msra.mxu0 %v698
        %1613 = vmatpush.msra.mxu0 %v694
        %1614 = vmatpush.msra.mxu0 %v690
        %1615 = vmatmul.f32.gmra.mxu0 %v1529
        %v1616 = vpop.f32.mrf.mxu0
        %v1617 = vadd.f32 0.0, %v1616
        %1618 = vdwg.mxu0
        %v1619 = vadd.f32 %v1535, %v1557
        %v1620 = vadd.f32 %v1536, %v1577
        %v1621 = vadd.f32 %v1537, %v1597
        %v1622 = vadd.f32 %v1538, %v1617
        %v1623 = vxor.u32 %v1619, 2147483648
        %v1624 = vmul.f32 %v1623, 1.442695
        %v1625 = vpow.pop %v1624
        %v1626 = vadd.f32 %v1625, 1.0
        %v1627 = vrcp.pop %v1626
        %v1628 = vmul.f32 %v1626, %v1627
        %v1629 = vsub.f32 1.0, %v1628
        %v1630 = vmul.f32 %v1627, %v1629
        %v1631 = vadd.f32 %v1627, %v1630
        %vm1632 = vweird.f32 %v1626
        %vm1633 = vweird.f32 %v1627
        %vm1634 = vmor %vm1632, %vm1633
        %v1635 = vsel %vm1634, %v1627, %v1631
        %v1636 = vand.u32 2147483647, %v1626
        %vm1637 = vcmp.eq.f32.partialorder %v1636, 8.507059e+37
        %v1638 = vand.u32 %v1626, 2147483648
        %v1639 = vor.u32 1.1754944e-38, %v1638
        %v1640 = vsel %vm1637, %v1639, %v1635
        %v1641 = vmul.f32 1.0, %v1640
        %v1642 = vxor.u32 %v1620, 2147483648
        %v1643 = vmul.f32 %v1642, 1.442695
        %v1644 = vpow.pop %v1643
        %v1645 = vadd.f32 %v1644, 1.0
        %v1646 = vrcp.pop %v1645
        %v1647 = vmul.f32 %v1645, %v1646
        %v1648 = vsub.f32 1.0, %v1647
        %v1649 = vmul.f32 %v1646, %v1648
        %v1650 = vadd.f32 %v1646, %v1649
        %vm1651 = vweird.f32 %v1645
        %vm1652 = vweird.f32 %v1646
        %vm1653 = vmor %vm1651, %vm1652
        %v1654 = vsel %vm1653, %v1646, %v1650
        %v1655 = vand.u32 2147483647, %v1645
        %vm1656 = vcmp.eq.f32.partialorder %v1655, 8.507059e+37
        %v1657 = vand.u32 %v1645, 2147483648
        %v1658 = vor.u32 1.1754944e-38, %v1657
        %v1659 = vsel %vm1656, %v1658, %v1654
        %v1660 = vmul.f32 1.0, %v1659
        %v1661 = vtanh.pop %v1621
        %v1662 = vxor.u32 %v1622, 2147483648
        %v1663 = vmul.f32 %v1662, 1.442695
        %v1664 = vpow.pop %v1663
        %v1665 = vadd.f32 %v1664, 1.0
        %v1666 = vrcp.pop %v1665
        %v1667 = vmul.f32 %v1665, %v1666
        %v1668 = vsub.f32 1.0, %v1667
        %v1669 = vmul.f32 %v1666, %v1668
        %v1670 = vadd.f32 %v1666, %v1669
        %vm1671 = vweird.f32 %v1665
        %vm1672 = vweird.f32 %v1666
        %vm1673 = vmor %vm1671, %vm1672
        %v1674 = vsel %vm1673, %v1666, %v1670
        %v1675 = vand.u32 2147483647, %v1665
        %vm1676 = vcmp.eq.f32.partialorder %v1675, 8.507059e+37
        %v1677 = vand.u32 %v1665, 2147483648
        %v1678 = vor.u32 1.1754944e-38, %v1677
        %v1679 = vsel %vm1676, %v1678, %v1674
        %v1680 = vmul.f32 1.0, %v1679
        %v1681 = vmul.f32 %v1660, %v1527
        %v1682 = vmul.f32 %v1641, %v1661
        %v1683 = vadd.f32 %v1681, %v1682
        %v1684 = vtanh.pop %v1683
        %v1685 = vmul.f32 %v1680, %v1684
        %s1686 = scalar_lea.vmem %s394, 40 [#allocation14]
        %1687 = vst [vmem:[%s1686] sm:$0xff] %v1685
        %s1688 = smul.u32 6, 4
        %s1689 = smul.addr %s1688, 8
        %s1690 = scalar_lea.vmem [#allocation2], %s1689
        %v1691 = vld [vmem:[%s1690] sm:$0xff]
        %v1692 = vld [vmem:[%s1690 + $0x8] sm:$0xff]
        %v1693 = vld [vmem:[%s1690 + $0x10] sm:$0xff]
        %v1694 = vld [vmem:[%s1690 + $0x18] sm:$0xff]
        %1695 = vmatpush.msra.mxu0 %v747
        %1696 = vmatpush.msra.mxu0 %v743
        %1697 = vmatpush.msra.mxu0 %v739
        %1698 = vmatpush.msra.mxu0 %v735
        %1699 = vmatpush.msra.mxu0 %v731
        %1700 = vmatpush.msra.mxu0 %v727
        %1701 = vmatpush.msra.mxu0 %v723
        %1702 = vmatpush.msra.mxu0 %v719
        %1703 = vmatpush.msra.mxu0 %v715
        %1704 = vmatpush.msra.mxu0 %v711
        %1705 = vmatpush.msra.mxu0 %v707
        %1706 = vmatpush.msra.mxu0 %v703
        %1707 = vmatpush.msra.mxu0 %v699
        %1708 = vmatpush.msra.mxu0 %v695
        %1709 = vmatpush.msra.mxu0 %v691
        %1710 = vmatpush.msra.mxu0 %v687
        %1711 = vmatmul.f32.gmra.mxu0 %v1685
        %v1712 = vpop.f32.mrf.mxu0
        %v1713 = vadd.f32 0.0, %v1712
        %1714 = vdwg.mxu0
        %1715 = vmatpush.msra.mxu0 %v748
        %1716 = vmatpush.msra.mxu0 %v744
        %1717 = vmatpush.msra.mxu0 %v740
        %1718 = vmatpush.msra.mxu0 %v736
        %1719 = vmatpush.msra.mxu0 %v732
        %1720 = vmatpush.msra.mxu0 %v728
        %1721 = vmatpush.msra.mxu0 %v724
        %1722 = vmatpush.msra.mxu0 %v720
        %1723 = vmatpush.msra.mxu0 %v716
        %1724 = vmatpush.msra.mxu0 %v712
        %1725 = vmatpush.msra.mxu0 %v708
        %1726 = vmatpush.msra.mxu0 %v704
        %1727 = vmatpush.msra.mxu0 %v700
        %1728 = vmatpush.msra.mxu0 %v696
        %1729 = vmatpush.msra.mxu0 %v692
        %1730 = vmatpush.msra.mxu0 %v688
        %1731 = vmatmul.f32.gmra.mxu0 %v1685
        %v1732 = vpop.f32.mrf.mxu0
        %v1733 = vadd.f32 0.0, %v1732
        %1734 = vdwg.mxu0
        %1735 = vmatpush.msra.mxu0 %v749
        %1736 = vmatpush.msra.mxu0 %v745
        %1737 = vmatpush.msra.mxu0 %v741
        %1738 = vmatpush.msra.mxu0 %v737
        %1739 = vmatpush.msra.mxu0 %v733
        %1740 = vmatpush.msra.mxu0 %v729
        %1741 = vmatpush.msra.mxu0 %v725
        %1742 = vmatpush.msra.mxu0 %v721
        %1743 = vmatpush.msra.mxu0 %v717
        %1744 = vmatpush.msra.mxu0 %v713
        %1745 = vmatpush.msra.mxu0 %v709
        %1746 = vmatpush.msra.mxu0 %v705
        %1747 = vmatpush.msra.mxu0 %v701
        %1748 = vmatpush.msra.mxu0 %v697
        %1749 = vmatpush.msra.mxu0 %v693
        %1750 = vmatpush.msra.mxu0 %v689
        %1751 = vmatmul.f32.gmra.mxu0 %v1685
        %v1752 = vpop.f32.mrf.mxu0
        %v1753 = vadd.f32 0.0, %v1752
        %1754 = vdwg.mxu0
        %1755 = vmatpush.msra.mxu0 %v750
        %1756 = vmatpush.msra.mxu0 %v746
        %1757 = vmatpush.msra.mxu0 %v742
        %1758 = vmatpush.msra.mxu0 %v738
        %1759 = vmatpush.msra.mxu0 %v734
        %1760 = vmatpush.msra.mxu0 %v730
        %1761 = vmatpush.msra.mxu0 %v726
        %1762 = vmatpush.msra.mxu0 %v722
        %1763 = vmatpush.msra.mxu0 %v718
        %1764 = vmatpush.msra.mxu0 %v714
        %1765 = vmatpush.msra.mxu0 %v710
        %1766 = vmatpush.msra.mxu0 %v706
        %1767 = vmatpush.msra.mxu0 %v702
        %1768 = vmatpush.msra.mxu0 %v698
        %1769 = vmatpush.msra.mxu0 %v694
        %1770 = vmatpush.msra.mxu0 %v690
        %1771 = vmatmul.f32.gmra.mxu0 %v1685
        %v1772 = vpop.f32.mrf.mxu0
        %v1773 = vadd.f32 0.0, %v1772
        %1774 = vdwg.mxu0
        %v1775 = vadd.f32 %v1691, %v1713
        %v1776 = vadd.f32 %v1692, %v1733
        %v1777 = vadd.f32 %v1693, %v1753
        %v1778 = vadd.f32 %v1694, %v1773
        %v1779 = vxor.u32 %v1775, 2147483648
        %v1780 = vmul.f32 %v1779, 1.442695
        %v1781 = vpow.pop %v1780
        %v1782 = vadd.f32 %v1781, 1.0
        %v1783 = vrcp.pop %v1782
        %v1784 = vmul.f32 %v1782, %v1783
        %v1785 = vsub.f32 1.0, %v1784
        %v1786 = vmul.f32 %v1783, %v1785
        %v1787 = vadd.f32 %v1783, %v1786
        %vm1788 = vweird.f32 %v1782
        %vm1789 = vweird.f32 %v1783
        %vm1790 = vmor %vm1788, %vm1789
        %v1791 = vsel %vm1790, %v1783, %v1787
        %v1792 = vand.u32 2147483647, %v1782
        %vm1793 = vcmp.eq.f32.partialorder %v1792, 8.507059e+37
        %v1794 = vand.u32 %v1782, 2147483648
        %v1795 = vor.u32 1.1754944e-38, %v1794
        %v1796 = vsel %vm1793, %v1795, %v1791
        %v1797 = vmul.f32 1.0, %v1796
        %v1798 = vxor.u32 %v1776, 2147483648
        %v1799 = vmul.f32 %v1798, 1.442695
        %v1800 = vpow.pop %v1799
        %v1801 = vadd.f32 %v1800, 1.0
        %v1802 = vrcp.pop %v1801
        %v1803 = vmul.f32 %v1801, %v1802
        %v1804 = vsub.f32 1.0, %v1803
        %v1805 = vmul.f32 %v1802, %v1804
        %v1806 = vadd.f32 %v1802, %v1805
        %vm1807 = vweird.f32 %v1801
        %vm1808 = vweird.f32 %v1802
        %vm1809 = vmor %vm1807, %vm1808
        %v1810 = vsel %vm1809, %v1802, %v1806
        %v1811 = vand.u32 2147483647, %v1801
        %vm1812 = vcmp.eq.f32.partialorder %v1811, 8.507059e+37
        %v1813 = vand.u32 %v1801, 2147483648
        %v1814 = vor.u32 1.1754944e-38, %v1813
        %v1815 = vsel %vm1812, %v1814, %v1810
        %v1816 = vmul.f32 1.0, %v1815
        %v1817 = vtanh.pop %v1777
        %v1818 = vxor.u32 %v1778, 2147483648
        %v1819 = vmul.f32 %v1818, 1.442695
        %v1820 = vpow.pop %v1819
        %v1821 = vadd.f32 %v1820, 1.0
        %v1822 = vrcp.pop %v1821
        %v1823 = vmul.f32 %v1821, %v1822
        %v1824 = vsub.f32 1.0, %v1823
        %v1825 = vmul.f32 %v1822, %v1824
        %v1826 = vadd.f32 %v1822, %v1825
        %vm1827 = vweird.f32 %v1821
        %vm1828 = vweird.f32 %v1822
        %vm1829 = vmor %vm1827, %vm1828
        %v1830 = vsel %vm1829, %v1822, %v1826
        %v1831 = vand.u32 2147483647, %v1821
        %vm1832 = vcmp.eq.f32.partialorder %v1831, 8.507059e+37
        %v1833 = vand.u32 %v1821, 2147483648
        %v1834 = vor.u32 1.1754944e-38, %v1833
        %v1835 = vsel %vm1832, %v1834, %v1830
        %v1836 = vmul.f32 1.0, %v1835
        %v1837 = vmul.f32 %v1816, %v1683
        %v1838 = vmul.f32 %v1797, %v1817
        %v1839 = vadd.f32 %v1837, %v1838
        %v1840 = vtanh.pop %v1839
        %v1841 = vmul.f32 %v1836, %v1840
        %s1842 = scalar_lea.vmem %s394, 48 [#allocation14]
        %1843 = vst [vmem:[%s1842] sm:$0xff] %v1841
        %s1844 = smul.u32 7, 4
        %s1845 = smul.addr %s1844, 8
        %s1846 = scalar_lea.vmem [#allocation2], %s1845
        %v1847 = vld [vmem:[%s1846] sm:$0xff]
        %v1848 = vld [vmem:[%s1846 + $0x8] sm:$0xff]
        %v1849 = vld [vmem:[%s1846 + $0x10] sm:$0xff]
        %v1850 = vld [vmem:[%s1846 + $0x18] sm:$0xff]
        %1851 = vmatpush.msra.mxu0 %v747
        %1852 = vmatpush.msra.mxu0 %v743
        %1853 = vmatpush.msra.mxu0 %v739
        %1854 = vmatpush.msra.mxu0 %v735
        %1855 = vmatpush.msra.mxu0 %v731
        %1856 = vmatpush.msra.mxu0 %v727
        %1857 = vmatpush.msra.mxu0 %v723
        %1858 = vmatpush.msra.mxu0 %v719
        %1859 = vmatpush.msra.mxu0 %v715
        %1860 = vmatpush.msra.mxu0 %v711
        %1861 = vmatpush.msra.mxu0 %v707
        %1862 = vmatpush.msra.mxu0 %v703
        %1863 = vmatpush.msra.mxu0 %v699
        %1864 = vmatpush.msra.mxu0 %v695
        %1865 = vmatpush.msra.mxu0 %v691
        %1866 = vmatpush.msra.mxu0 %v687
        %1867 = vmatmul.f32.gmra.mxu0 %v1841
        %v1868 = vpop.f32.mrf.mxu0
        %v1869 = vadd.f32 0.0, %v1868
        %1870 = vdwg.mxu0
        %1871 = vmatpush.msra.mxu0 %v748
        %1872 = vmatpush.msra.mxu0 %v744
        %1873 = vmatpush.msra.mxu0 %v740
        %1874 = vmatpush.msra.mxu0 %v736
        %1875 = vmatpush.msra.mxu0 %v732
        %1876 = vmatpush.msra.mxu0 %v728
        %1877 = vmatpush.msra.mxu0 %v724
        %1878 = vmatpush.msra.mxu0 %v720
        %1879 = vmatpush.msra.mxu0 %v716
        %1880 = vmatpush.msra.mxu0 %v712
        %1881 = vmatpush.msra.mxu0 %v708
        %1882 = vmatpush.msra.mxu0 %v704
        %1883 = vmatpush.msra.mxu0 %v700
        %1884 = vmatpush.msra.mxu0 %v696
        %1885 = vmatpush.msra.mxu0 %v692
        %1886 = vmatpush.msra.mxu0 %v688
        %1887 = vmatmul.f32.gmra.mxu0 %v1841
        %v1888 = vpop.f32.mrf.mxu0
        %v1889 = vadd.f32 0.0, %v1888
        %1890 = vdwg.mxu0
        %1891 = vmatpush.msra.mxu0 %v749
        %1892 = vmatpush.msra.mxu0 %v745
        %1893 = vmatpush.msra.mxu0 %v741
        %1894 = vmatpush.msra.mxu0 %v737
        %1895 = vmatpush.msra.mxu0 %v733
        %1896 = vmatpush.msra.mxu0 %v729
        %1897 = vmatpush.msra.mxu0 %v725
        %1898 = vmatpush.msra.mxu0 %v721
        %1899 = vmatpush.msra.mxu0 %v717
        %1900 = vmatpush.msra.mxu0 %v713
        %1901 = vmatpush.msra.mxu0 %v709
        %1902 = vmatpush.msra.mxu0 %v705
        %1903 = vmatpush.msra.mxu0 %v701
        %1904 = vmatpush.msra.mxu0 %v697
        %1905 = vmatpush.msra.mxu0 %v693
        %1906 = vmatpush.msra.mxu0 %v689
        %1907 = vmatmul.f32.gmra.mxu0 %v1841
        %v1908 = vpop.f32.mrf.mxu0
        %v1909 = vadd.f32 0.0, %v1908
        %1910 = vdwg.mxu0
        %1911 = vmatpush.msra.mxu0 %v750
        %1912 = vmatpush.msra.mxu0 %v746
        %1913 = vmatpush.msra.mxu0 %v742
        %1914 = vmatpush.msra.mxu0 %v738
        %1915 = vmatpush.msra.mxu0 %v734
        %1916 = vmatpush.msra.mxu0 %v730
        %1917 = vmatpush.msra.mxu0 %v726
        %1918 = vmatpush.msra.mxu0 %v722
        %1919 = vmatpush.msra.mxu0 %v718
        %1920 = vmatpush.msra.mxu0 %v714
        %1921 = vmatpush.msra.mxu0 %v710
        %1922 = vmatpush.msra.mxu0 %v706
        %1923 = vmatpush.msra.mxu0 %v702
        %1924 = vmatpush.msra.mxu0 %v698
        %1925 = vmatpush.msra.mxu0 %v694
        %1926 = vmatpush.msra.mxu0 %v690
        %1927 = vmatmul.f32.gmra.mxu0 %v1841
        %v1928 = vpop.f32.mrf.mxu0
        %v1929 = vadd.f32 0.0, %v1928
        %1930 = vdwg.mxu0
        %v1931 = vadd.f32 %v1847, %v1869
        %v1932 = vadd.f32 %v1848, %v1889
        %v1933 = vadd.f32 %v1849, %v1909
        %v1934 = vadd.f32 %v1850, %v1929
        %v1935 = vxor.u32 %v1931, 2147483648
        %v1936 = vmul.f32 %v1935, 1.442695
        %v1937 = vpow.pop %v1936
        %v1938 = vadd.f32 %v1937, 1.0
        %v1939 = vrcp.pop %v1938
        %v1940 = vmul.f32 %v1938, %v1939
        %v1941 = vsub.f32 1.0, %v1940
        %v1942 = vmul.f32 %v1939, %v1941
        %v1943 = vadd.f32 %v1939, %v1942
        %vm1944 = vweird.f32 %v1938
        %vm1945 = vweird.f32 %v1939
        %vm1946 = vmor %vm1944, %vm1945
        %v1947 = vsel %vm1946, %v1939, %v1943
        %v1948 = vand.u32 2147483647, %v1938
        %vm1949 = vcmp.eq.f32.partialorder %v1948, 8.507059e+37
        %v1950 = vand.u32 %v1938, 2147483648
        %v1951 = vor.u32 1.1754944e-38, %v1950
        %v1952 = vsel %vm1949, %v1951, %v1947
        %v1953 = vmul.f32 1.0, %v1952
        %v1954 = vxor.u32 %v1932, 2147483648
        %v1955 = vmul.f32 %v1954, 1.442695
        %v1956 = vpow.pop %v1955
        %v1957 = vadd.f32 %v1956, 1.0
        %v1958 = vrcp.pop %v1957
        %v1959 = vmul.f32 %v1957, %v1958
        %v1960 = vsub.f32 1.0, %v1959
        %v1961 = vmul.f32 %v1958, %v1960
        %v1962 = vadd.f32 %v1958, %v1961
        %vm1963 = vweird.f32 %v1957
        %vm1964 = vweird.f32 %v1958
        %vm1965 = vmor %vm1963, %vm1964
        %v1966 = vsel %vm1965, %v1958, %v1962
        %v1967 = vand.u32 2147483647, %v1957
        %vm1968 = vcmp.eq.f32.partialorder %v1967, 8.507059e+37
        %v1969 = vand.u32 %v1957, 2147483648
        %v1970 = vor.u32 1.1754944e-38, %v1969
        %v1971 = vsel %vm1968, %v1970, %v1966
        %v1972 = vmul.f32 1.0, %v1971
        %v1973 = vtanh.pop %v1933
        %v1974 = vxor.u32 %v1934, 2147483648
        %v1975 = vmul.f32 %v1974, 1.442695
        %v1976 = vpow.pop %v1975
        %v1977 = vadd.f32 %v1976, 1.0
        %v1978 = vrcp.pop %v1977
        %v1979 = vmul.f32 %v1977, %v1978
        %v1980 = vsub.f32 1.0, %v1979
        %v1981 = vmul.f32 %v1978, %v1980
        %v1982 = vadd.f32 %v1978, %v1981
        %vm1983 = vweird.f32 %v1977
        %vm1984 = vweird.f32 %v1978
        %vm1985 = vmor %vm1983, %vm1984
        %v1986 = vsel %vm1985, %v1978, %v1982
        %v1987 = vand.u32 2147483647, %v1977
        %vm1988 = vcmp.eq.f32.partialorder %v1987, 8.507059e+37
        %v1989 = vand.u32 %v1977, 2147483648
        %v1990 = vor.u32 1.1754944e-38, %v1989
        %v1991 = vsel %vm1988, %v1990, %v1986
        %v1992 = vmul.f32 1.0, %v1991
        %v1993 = vmul.f32 %v1972, %v1839
        %v1994 = vmul.f32 %v1953, %v1973
        %v1995 = vadd.f32 %v1993, %v1994
        %v1996 = vtanh.pop %v1995
        %v1997 = vmul.f32 %v1992, %v1996
        %s1998 = scalar_lea.vmem %s394, 56 [#allocation14]
        %1999 = vst [vmem:[%s1998] sm:$0xff] %v1997
        %2000 = vst [vmem:[#allocation15] sm:$0xff] %v1997
        %2001 = vst [vmem:[#allocation17] sm:$0xff] %v1995
        %s2002 = sand.u32 %s169, 1
        %s2003 = scalar_lea.sflag [#allocation5], %s2002
        %s2004 = sand.u32 %s169, 1
        %s2005 = smul.addr %s2004, 64
        %s2006 = scalar_lea.vmem [#allocation14], %s2005
        // Predicated region
        $region73: #{tpu_custom_call.1} parent=43 // pred_check
          %p2007 = pneg %p179
        $region74: #{tpu_custom_call.1} parent=43 // pred_check_branch
          %2009 = sbr.rel (%p2007) target = $region76
        $region75: #{tpu_custom_call.1} parent=43 // pred_region
          %s2010 = smul.u32 8, %s30
          %2012 = vsyncadd %s2003, 0
          %s2013 = smul.addr %s2010, 8
          %s2014 = scalar_lea.hbm %s6, %s2013
          %s2015 = sshll.u32 %s2006, 4
          %s2016 = int_to_ptr.vmem [resolvable:$true] %s2015
          %s2017 = sshll.u32 %s2014, 4
          %s2018 = int_to_ptr.hbm [resolvable:$true] %s2017
          %2023 = dma.vmem_to_hbm [thread:$0]  %s2016, 1024, %s2018, %s2003, 128, 128, 8
        $region76: #{tpu_custom_call.1} parent=43 // pred_fallthru
          _
        // Predicated region
        $region77: #{tpu_custom_call.1} parent=43 // pred_check
          %p2024 = pneg %p200
        $region78: #{tpu_custom_call.1} parent=43 // pred_check_branch
          %2026 = sbr.rel (%p2024) target = $region80
        $region79: #{tpu_custom_call.1} parent=43 // pred_region
          %2028 = vsyncadd [#allocation16], 0
          %s2030 = sshll.u32 [#allocation15], 4
          %s2031 = int_to_ptr.vmem [resolvable:$true] %s2030
          %s2032 = sshll.u32 %s7, 4
          %s2033 = int_to_ptr.hbm [resolvable:$true] %s2032
          %2035 = dma.vmem_to_hbm [thread:$0]  %s2031, 128, %s2033, [#allocation16]
        $region80: #{tpu_custom_call.1} parent=43 // pred_fallthru
          _
        // Predicated region
        $region81: #{tpu_custom_call.1} parent=43 // pred_check
          %p2036 = pneg %p221
        $region82: #{tpu_custom_call.1} parent=43 // pred_check_branch
          %2038 = sbr.rel (%p2036) target = $region84
        $region83: #{tpu_custom_call.1} parent=43 // pred_region
          %2040 = vsyncadd [#allocation16], 0
          %s2042 = sshll.u32 [#allocation17], 4
          %s2043 = int_to_ptr.vmem [resolvable:$true] %s2042
          %s2044 = sshll.u32 %s8, 4
          %s2045 = int_to_ptr.hbm [resolvable:$true] %s2044
          %2047 = dma.vmem_to_hbm [thread:$0]  %s2043, 128, %s2045, [#allocation16]
        $region84: #{tpu_custom_call.1} parent=43 // pred_fallthru
          _
        // Predicated region
        $region85: #{tpu_custom_call.1} parent=43 // pred_check
          %p2048 = pneg %p200
        $region86: #{tpu_custom_call.1} parent=43 // pred_check_branch
          %2050 = sbr.rel (%p2048) target = $region88
        $region87: #{tpu_custom_call.1} parent=43 // pred_region
          %2052 = dma.done [#allocation16], 128
        $region88: #{tpu_custom_call.1} parent=43 // pred_fallthru
          _
        // Predicated region
        $region89: #{tpu_custom_call.1} parent=43 // pred_check
          %p2053 = pneg %p221
        $region90: #{tpu_custom_call.1} parent=43 // pred_check_branch
          %2055 = sbr.rel (%p2053) target = $region92
        $region91: #{tpu_custom_call.1} parent=43 // pred_region
          %2057 = dma.done [#allocation16], 128
        $region92: #{tpu_custom_call.1} parent=43 // pred_fallthru
          _
      $region44: #{tpu_custom_call.1} parent=5 // pred_fallthru
        _
      %p2058 = scmp.le.s32.totalorder 2, %s25
      // Predicated region
      $region93: #{tpu_custom_call.1} parent=5 // pred_check
        %p2059 = pneg %p2058
      $region94: #{tpu_custom_call.1} parent=5 // pred_check_branch
        %2061 = sbr.rel (%p2059) target = $region96
      $region95: #{tpu_custom_call.1} parent=5 // pred_region
        %s2062 = ssub.s32 %s25, 2
        // Predicated region
        $region97: #{tpu_custom_call.1} parent=95 // pred_check
          %p2063 = pneg %p185
        $region98: #{tpu_custom_call.1} parent=95 // pred_check_branch
          %2065 = sbr.rel (%p2063) target = $region100
        $region99: #{tpu_custom_call.1} parent=95 // pred_region
          %s2066 = sand.u32 %s170, 1
          %s2067 = scalar_lea.sflag [#allocation5], %s2066
          %s2068 = sand.u32 %s170, 1
          %s2069 = smul.addr %s2068, 64
          %s2070 = scalar_lea.vmem [#allocation14], %s2069
          %2072 = dma.done %s2067, 1024
        $region100: #{tpu_custom_call.1} parent=95 // pred_fallthru
          _
      $region96: #{tpu_custom_call.1} parent=5 // pred_fallthru
        _
    $region6: #{tpu_custom_call.1} parent=1 // loop_footer
      %s29 = sadd.s32 1, %s25
    $region7: #{tpu_custom_call.1} parent=1 // loop_footer_branch
      %24 = sbr.rel target = $region3
    $region8: #{tpu_custom_call.1} parent=1 // loop_exit
      _
    %2073 = vsyncpa [#allocation4], 1
    %s2074 = scalar_lea.sflag [#allocation4], 1
    %2075 = vsyncpa %s2074, 1
    %2076 = vsyncpa [#allocation7], 1
    %2077 = vsyncpa [#allocation10], 1
    %2078 = vsyncpa [#allocation13], 1
    %2079 = vsyncpa [#allocation5], 1
    %s2080 = scalar_lea.sflag [#allocation5], 1
    %2081 = vsyncpa %s2080, 1
    %2082 = vsyncpa [#allocation16], 1

</llo_original>
